<compile_context>
chip_gen: v7x
topology: tpu7x:2x2x1
jax: 0.10.0
libtpu: 0.0.40
codegen_flags: <defaults>
</compile_context>

<pallas_src>
import functools
import math

import jax
import jax.numpy as jnp
from jax import lax
from jax.experimental import pallas as pl
from jax.experimental.pallas import tpu as pltpu


# ---------------------------------------------------------------------------
# Kernel
# ---------------------------------------------------------------------------

def _layer_norm(x, w, b, eps=1e-5):
    mu = jnp.mean(x, axis=-1, keepdims=True)
    xc = x - mu
    var = jnp.mean(xc * xc, axis=-1, keepdims=True)
    return xc * lax.rsqrt(var + eps) * w + b


def encoder_kernel(
    src_ref, pos_ref,
    wq_ref, wk_ref, wv_ref, bq_ref, bk_ref, bv_ref,
    wo_ref, bo_ref, w1_ref, b1_ref, w2_ref, b2_ref,
    n1w_ref, n1b_ref, n2w_ref, n2b_ref,
    nfw_ref, nfb_ref,
    out_ref, attn_scr,
    *, nhead, head_dim, apply_final_norm):
    layer = pl.program_id(1)          # grid = (batch, layer); layer is last

    # Initialize the resident output block (carried activation) from src once,
    # at layer 0 of this batch element.  out_ref's block index is constant
    # across the layer axis, so it stays resident in VMEM across layers.
    @pl.when(layer == 0)
    def _():
        out_ref[...] = src_ref[...]

    x = out_ref[0]                    # (S, D) float32, carried across layers
    pos = pos_ref[0]                  # (S, D) float32
    scale = 1.0 / math.sqrt(head_dim)

    # --- self attention: q = k = src + pos, v = src ---
    xp_b = (x + pos).astype(jnp.bfloat16)
    x_b = x.astype(jnp.bfloat16)

    # Full-width projections (N = D) on the MXU: bf16 inputs, f32 accumulation.
    q = jnp.dot(xp_b, wq_ref[0], preferred_element_type=jnp.float32) + bq_ref[0]
    k = jnp.dot(xp_b, wk_ref[0], preferred_element_type=jnp.float32) + bk_ref[0]
    v = jnp.dot(x_b, wv_ref[0], preferred_element_type=jnp.float32) + bv_ref[0]

    q_b = q.astype(jnp.bfloat16)
    k_b = k.astype(jnp.bfloat16)
    v_b = v.astype(jnp.bfloat16)

    # Per-head attention (static unroll, small H); each head's output is stored
    # into its lane slice of attn_scr so the out-projection below can run as a
    # single full-K (S,D)@(D,D) matmul.
    for h in range(nhead):
        sl = slice(h * head_dim, (h + 1) * head_dim)
        qh = q_b[:, sl]
        kh = k_b[:, sl]
        vh = v_b[:, sl]
        s = jnp.einsum('qd,kd->qk', qh, kh,
                       preferred_element_type=jnp.float32) * scale
        s = s - jnp.max(s, axis=-1, keepdims=True)
        p = jnp.exp(s)
        p = p * pl.reciprocal(jnp.sum(p, axis=-1, keepdims=True), approx=True)
        oh = jnp.dot(p.astype(jnp.bfloat16), vh,
                     preferred_element_type=jnp.float32)
        attn_scr[:, sl] = oh          # head's intermediates die here

    # Single full-K output projection.
    attn = jnp.dot(attn_scr[...].astype(jnp.bfloat16), wo_ref[0],
                   preferred_element_type=jnp.float32) + bo_ref[0]

    x = _layer_norm(x + attn, n1w_ref[0], n1b_ref[0])     # dropout1 = identity

    # --- feed-forward (relu): bf16 matmul inputs, f32 accumulation ---
    h1 = jnp.maximum(
        jnp.dot(x.astype(jnp.bfloat16), w1_ref[0],
                preferred_element_type=jnp.float32) + b1_ref[0], 0.0)
    h2 = jnp.dot(h1.astype(jnp.bfloat16), w2_ref[0],
                 preferred_element_type=jnp.float32) + b2_ref[0]
    x = _layer_norm(x + h2, n2w_ref[0], n2b_ref[0])       # dropout2 = identity

    out_ref[0] = x.astype(out_ref.dtype)                  # carry to next layer

    # --- optional final LayerNorm (self.norm) on the last layer ---
    if apply_final_norm:
        @pl.when(layer == pl.num_programs(1) - 1)
        def _():
            out_ref[0] = _layer_norm(x, nfw_ref[...], nfb_ref[...]).astype(out_ref.dtype)


# ---------------------------------------------------------------------------
# Wrapper
# ---------------------------------------------------------------------------

_STACKED = ('wq', 'wk', 'wv', 'bq', 'bk', 'bv', 'wo', 'bo',
            'w1', 'b1', 'w2', 'b2', 'n1w', 'n1b', 'n2w', 'n2b')
_W_BF16 = ('wq', 'wk', 'wv', 'wo', 'w1', 'w2')


def transformer_encoder_forward(src, pos, params, nhead, apply_final_norm=True):
    """src/pos in PyTorch layout (S, B, D). Returns (S, B, D) like
    TransformerEncoder.forward (masks unsupported, eval mode)."""
    S, B, D = src.shape
    L = params['wq'].shape[0]

    # One layout transform for the whole fused stack: (S,B,D) -> (B,S,D).
    src_r = jnp.transpose(src, (1, 0, 2))
    pos_r = jnp.transpose(pos, (1, 0, 2))

    stacked = [params[n] for n in _STACKED]

    def layer_spec(a):
        nd = a.ndim
        return pl.BlockSpec((1,) + a.shape[1:],
                            lambda b, l, nd=nd: (l,) + (0,) * (nd - 1))

    in_specs = (
        [pl.BlockSpec((1, S, D), lambda b, l: (b, 0, 0)),    # src (layer-0 init)
         pl.BlockSpec((1, S, D), lambda b, l: (b, 0, 0))]    # pos
        + [layer_spec(a) for a in stacked]                   # per-layer weights
        + [pl.BlockSpec((1, D), lambda b, l: (0, 0)),        # final norm w
           pl.BlockSpec((1, D), lambda b, l: (0, 0))]        # final norm b
    )

    kernel = functools.partial(
        encoder_kernel, nhead=nhead, head_dim=D // nhead,
        apply_final_norm=apply_final_norm)

    out = pl.pallas_call(
        kernel,
        out_shape=jax.ShapeDtypeStruct((B, S, D), jnp.float32),
        grid=(B, L),
        in_specs=in_specs,
        # Constant block index across the layer axis -> resident accumulator;
        # it doubles as the carried activation (no x_scr scratch needed).
        out_specs=pl.BlockSpec((1, S, D), lambda b, l: (b, 0, 0)),
        scratch_shapes=[pltpu.VMEM((S, D), jnp.float32)],    # head-output slab
        compiler_params=pltpu.CompilerParams(
            dimension_semantics=("parallel", "arbitrary"),
            vmem_limit_bytes=48 * 1024 * 1024),
    )(src_r, pos_r, *stacked, params['nfw'], params['nfb'])

    # Back to PyTorch layout (S, B, D).
    return jnp.transpose(out, (1, 0, 2))


# ---------------------------------------------------------------------------
# Deterministic parameter init (synthetic weights, PyTorch layouts converted
# host-side: pre-transposed to (in,out), L-stacked, matmul weights in bf16)
# ---------------------------------------------------------------------------

def init_params(key, d_model, dim_ff, num_layers, nhead):
    del nhead  # heads are split in-kernel by lane slicing; no per-head weights

    def dense(k, shape, scale=0.05):
        return scale * jax.random.normal(k, shape, jnp.float32)

    per_layer = {n: [] for n in _STACKED}
    for i in range(num_layers):
        ks = jax.random.split(jax.random.fold_in(key, i), 8)
        in_w = dense(ks[0], (3 * d_model, d_model))     # nn.MultiheadAttention in_proj_weight
        in_b = dense(ks[1], (3 * d_model,), 0.01)       # in_proj_bias
        out_w = dense(ks[2], (d_model, d_model))        # out_proj.weight
        out_b = dense(ks[3], (d_model,), 0.01)
        l1w = dense(ks[4], (dim_ff, d_model))           # linear1.weight
        l1b = dense(ks[5], (dim_ff,), 0.01)
        l2w = dense(ks[6], (d_model, dim_ff))           # linear2.weight
        l2b = dense(ks[7], (d_model,), 0.01)

        wq_t, wk_t, wv_t = in_w[:d_model], in_w[d_model:2 * d_model], in_w[2 * d_model:]
        bq_t, bk_t, bv_t = in_b[:d_model], in_b[d_model:2 * d_model], in_b[2 * d_model:]

        per_layer['wq'].append(wq_t.T)                  # (D_in, D_out): y = x @ w
        per_layer['wk'].append(wk_t.T)
        per_layer['wv'].append(wv_t.T)
        per_layer['bq'].append(bq_t[None, :])
        per_layer['bk'].append(bk_t[None, :])
        per_layer['bv'].append(bv_t[None, :])
        per_layer['wo'].append(out_w.T)
        per_layer['bo'].append(out_b[None, :])
        per_layer['w1'].append(l1w.T)
        per_layer['b1'].append(l1b[None, :])
        per_layer['w2'].append(l2w.T)
        per_layer['b2'].append(l2b[None, :])
        per_layer['n1w'].append(jnp.ones((1, d_model), jnp.float32))
        per_layer['n1b'].append(jnp.zeros((1, d_model), jnp.float32))
        per_layer['n2w'].append(jnp.ones((1, d_model), jnp.float32))
        per_layer['n2b'].append(jnp.zeros((1, d_model), jnp.float32))

    params = {n: jnp.stack(v, axis=0) for n, v in per_layer.items()}
    for n in _W_BF16:
        params[n] = params[n].astype(jnp.bfloat16)       # halve weight DMA / VMEM
    params['nfw'] = jnp.ones((1, d_model), jnp.float32)  # optional final self.norm
    params['nfb'] = jnp.zeros((1, d_model), jnp.float32)
    return params


# ---------------------------------------------------------------------------
# Main
# ---------------------------------------------------------------------------

if __name__ == "__main__":
    B = 2              # batch
    S = 16             # source length (e.g. flattened 4x4 feature map)
    D_MODEL = 32
    NHEAD = 4
    DIM_FF = 64
    NUM_LAYERS = 2

    key = jax.random.PRNGKey(0)
    k1, k2, kp = jax.random.split(key, 3)

    # PyTorch layout: (seq, batch, d_model)
    src = jax.random.normal(k1, (S, B, D_MODEL), jnp.float32)
    pos = jax.random.normal(k2, (S, B, D_MODEL), jnp.float32)

    params = init_params(kp, D_MODEL, DIM_FF, NUM_LAYERS, NHEAD)

    out = transformer_encoder_forward(src, pos, params, NHEAD, apply_final_norm=True)
    out = jax.block_until_ready(out)

    assert out.shape == (S, B, D_MODEL), out.shape
    assert bool(jnp.all(jnp.isfinite(out)))
    print("KERNEL_OK")
</pallas_src>

<mosaic_0001>
module attributes {stable_mosaic.version = 11 : i64} {
  func.func @encoder_kernel(%arg0: i32, %arg1: i32, %arg2: memref<1x16x32xf32, #tpu.memory_space<vmem>>, %arg3: memref<1x16x32xf32, #tpu.memory_space<vmem>>, %arg4: memref<1x32x32xbf16, #tpu.memory_space<vmem>>, %arg5: memref<1x32x32xbf16, #tpu.memory_space<vmem>>, %arg6: memref<1x32x32xbf16, #tpu.memory_space<vmem>>, %arg7: memref<1x1x32xf32, #tpu.memory_space<vmem>>, %arg8: memref<1x1x32xf32, #tpu.memory_space<vmem>>, %arg9: memref<1x1x32xf32, #tpu.memory_space<vmem>>, %arg10: memref<1x32x32xbf16, #tpu.memory_space<vmem>>, %arg11: memref<1x1x32xf32, #tpu.memory_space<vmem>>, %arg12: memref<1x32x64xbf16, #tpu.memory_space<vmem>>, %arg13: memref<1x1x64xf32, #tpu.memory_space<vmem>>, %arg14: memref<1x64x32xbf16, #tpu.memory_space<vmem>>, %arg15: memref<1x1x32xf32, #tpu.memory_space<vmem>>, %arg16: memref<1x1x32xf32, #tpu.memory_space<vmem>>, %arg17: memref<1x1x32xf32, #tpu.memory_space<vmem>>, %arg18: memref<1x1x32xf32, #tpu.memory_space<vmem>>, %arg19: memref<1x1x32xf32, #tpu.memory_space<vmem>>, %arg20: memref<1x32xf32, #tpu.memory_space<vmem>>, %arg21: memref<1x32xf32, #tpu.memory_space<vmem>>, %arg22: memref<1x16x32xf32, #tpu.memory_space<vmem>>, %arg23: memref<16x32xf32, #tpu.memory_space<vmem>>) attributes {dimension_semantics = [#tpu.dimension_semantics<parallel>, #tpu.dimension_semantics<arbitrary>], iteration_bounds = array<i64: 2, 2>, scalar_prefetch = 0 : i64, scratch_operands = 1 : i64, tpu.core_type = #tpu.core_type<tc>, window_params = [{transform_indices = @transform_0, window_bounds = array<i64: 1, 16, 32>}, {transform_indices = @transform_1, window_bounds = array<i64: 1, 16, 32>}, {transform_indices = @transform_2, window_bounds = array<i64: 1, 32, 32>}, {transform_indices = @transform_3, window_bounds = array<i64: 1, 32, 32>}, {transform_indices = @transform_4, window_bounds = array<i64: 1, 32, 32>}, {transform_indices = @transform_5, window_bounds = array<i64: 1, 1, 32>}, {transform_indices = @transform_6, window_bounds = array<i64: 1, 1, 32>}, {transform_indices = @transform_7, window_bounds = array<i64: 1, 1, 32>}, {transform_indices = @transform_8, window_bounds = array<i64: 1, 32, 32>}, {transform_indices = @transform_9, window_bounds = array<i64: 1, 1, 32>}, {transform_indices = @transform_10, window_bounds = array<i64: 1, 32, 64>}, {transform_indices = @transform_11, window_bounds = array<i64: 1, 1, 64>}, {transform_indices = @transform_12, window_bounds = array<i64: 1, 64, 32>}, {transform_indices = @transform_13, window_bounds = array<i64: 1, 1, 32>}, {transform_indices = @transform_14, window_bounds = array<i64: 1, 1, 32>}, {transform_indices = @transform_15, window_bounds = array<i64: 1, 1, 32>}, {transform_indices = @transform_16, window_bounds = array<i64: 1, 1, 32>}, {transform_indices = @transform_17, window_bounds = array<i64: 1, 1, 32>}, {pipeline_mode = #tpu.pipeline_mode<synchronous>, transform_indices = @transform_18, window_bounds = array<i64: 1, 32>}, {pipeline_mode = #tpu.pipeline_mode<synchronous>, transform_indices = @transform_19, window_bounds = array<i64: 1, 32>}, {transform_indices = @transform_20, window_bounds = array<i64: 1, 16, 32>}]} {
    %c0_i32 = arith.constant 0 : i32
    %0 = arith.cmpi eq, %arg1, %c0_i32 : i32
    %1 = arith.extui %0 : i1 to i32
    %c0_i32_0 = arith.constant 0 : i32
    %2 = arith.cmpi ne, %1, %c0_i32_0 : i32
    scf.if %2 {
      %c0_101 = arith.constant 0 : index
      %c0_102 = arith.constant 0 : index
      %c0_103 = arith.constant 0 : index
      %193 = vector.load %arg2[%c0_101, %c0_102, %c0_103] : memref<1x16x32xf32, #tpu.memory_space<vmem>>, vector<1x16x32xf32>
      %c0_104 = arith.constant 0 : index
      %c0_105 = arith.constant 0 : index
      %c0_106 = arith.constant 0 : index
      %194 = vector.load %arg22[%c0_104, %c0_105, %c0_106] : memref<1x16x32xf32, #tpu.memory_space<vmem>>, vector<1x16x32xf32>
      tpu.vector_store %arg22[%c0_104, %c0_105, %c0_106], %193 {strides = array<i32>} : memref<1x16x32xf32, #tpu.memory_space<vmem>>, vector<1x16x32xf32>,
    } else {
    }
    %c0 = arith.constant 0 : index
    %c0_1 = arith.constant 0 : index
    %c0_2 = arith.constant 0 : index
    %3 = vector.load %arg22[%c0, %c0_1, %c0_2] : memref<1x16x32xf32, #tpu.memory_space<vmem>>, vector<1x16x32xf32>
    %4 = vector.shape_cast %3 : vector<1x16x32xf32> to vector<16x32xf32>
    %c0_3 = arith.constant 0 : index
    %c0_4 = arith.constant 0 : index
    %c0_5 = arith.constant 0 : index
    %5 = vector.load %arg3[%c0_3, %c0_4, %c0_5] : memref<1x16x32xf32, #tpu.memory_space<vmem>>, vector<1x16x32xf32>
    %6 = vector.shape_cast %5 : vector<1x16x32xf32> to vector<16x32xf32>
    %7 = arith.addf %4, %6 : vector<16x32xf32>
    %8 = arith.truncf %7 : vector<16x32xf32> to vector<16x32xbf16>
    %9 = arith.truncf %4 : vector<16x32xf32> to vector<16x32xbf16>
    %c0_6 = arith.constant 0 : index
    %c0_7 = arith.constant 0 : index
    %c0_8 = arith.constant 0 : index
    %10 = vector.load %arg4[%c0_6, %c0_7, %c0_8] : memref<1x32x32xbf16, #tpu.memory_space<vmem>>, vector<1x32x32xbf16>
    %11 = vector.shape_cast %10 : vector<1x32x32xbf16> to vector<32x32xbf16>
    %cst = arith.constant dense<0.000000e+00> : vector<16x32xf32>
    %12 = tpu.matmul %8, %11, %cst {dimension_numbers = #tpu.dot_dimension_numbers<[1], [0], [0], [1], [0, 0, 1, 1], [], []>} : vector<16x32xbf16>, vector<32x32xbf16>, vector<16x32xf32> -> vector<16x32xf32>
    %c0_9 = arith.constant 0 : index
    %c0_10 = arith.constant 0 : index
    %c0_11 = arith.constant 0 : index
    %13 = vector.load %arg7[%c0_9, %c0_10, %c0_11] : memref<1x1x32xf32, #tpu.memory_space<vmem>>, vector<1x1x32xf32>
    %14 = vector.shape_cast %13 : vector<1x1x32xf32> to vector<1x32xf32>
    %15 = vector.broadcast %14 : vector<1x32xf32> to vector<16x32xf32>
    %16 = arith.addf %12, %15 : vector<16x32xf32>
    %c0_12 = arith.constant 0 : index
    %c0_13 = arith.constant 0 : index
    %c0_14 = arith.constant 0 : index
    %17 = vector.load %arg5[%c0_12, %c0_13, %c0_14] : memref<1x32x32xbf16, #tpu.memory_space<vmem>>, vector<1x32x32xbf16>
    %18 = vector.shape_cast %17 : vector<1x32x32xbf16> to vector<32x32xbf16>
    %cst_15 = arith.constant dense<0.000000e+00> : vector<16x32xf32>
    %19 = tpu.matmul %8, %18, %cst_15 {dimension_numbers = #tpu.dot_dimension_numbers<[1], [0], [0], [1], [0, 0, 1, 1], [], []>} : vector<16x32xbf16>, vector<32x32xbf16>, vector<16x32xf32> -> vector<16x32xf32>
    %c0_16 = arith.constant 0 : index
    %c0_17 = arith.constant 0 : index
    %c0_18 = arith.constant 0 : index
    %20 = vector.load %arg8[%c0_16, %c0_17, %c0_18] : memref<1x1x32xf32, #tpu.memory_space<vmem>>, vector<1x1x32xf32>
    %21 = vector.shape_cast %20 : vector<1x1x32xf32> to vector<1x32xf32>
    %22 = vector.broadcast %21 : vector<1x32xf32> to vector<16x32xf32>
    %23 = arith.addf %19, %22 : vector<16x32xf32>
    %c0_19 = arith.constant 0 : index
    %c0_20 = arith.constant 0 : index
    %c0_21 = arith.constant 0 : index
    %24 = vector.load %arg6[%c0_19, %c0_20, %c0_21] : memref<1x32x32xbf16, #tpu.memory_space<vmem>>, vector<1x32x32xbf16>
    %25 = vector.shape_cast %24 : vector<1x32x32xbf16> to vector<32x32xbf16>
    %cst_22 = arith.constant dense<0.000000e+00> : vector<16x32xf32>
    %26 = tpu.matmul %9, %25, %cst_22 {dimension_numbers = #tpu.dot_dimension_numbers<[1], [0], [0], [1], [0, 0, 1, 1], [], []>} : vector<16x32xbf16>, vector<32x32xbf16>, vector<16x32xf32> -> vector<16x32xf32>
    %c0_23 = arith.constant 0 : index
    %c0_24 = arith.constant 0 : index
    %c0_25 = arith.constant 0 : index
    %27 = vector.load %arg9[%c0_23, %c0_24, %c0_25] : memref<1x1x32xf32, #tpu.memory_space<vmem>>, vector<1x1x32xf32>
    %28 = vector.shape_cast %27 : vector<1x1x32xf32> to vector<1x32xf32>
    %29 = vector.broadcast %28 : vector<1x32xf32> to vector<16x32xf32>
    %30 = arith.addf %26, %29 : vector<16x32xf32>
    %31 = arith.truncf %16 : vector<16x32xf32> to vector<16x32xbf16>
    %32 = arith.truncf %23 : vector<16x32xf32> to vector<16x32xbf16>
    %33 = arith.truncf %30 : vector<16x32xf32> to vector<16x32xbf16>
    %34 = vector.extract_strided_slice %31 {offsets = [0, 0], sizes = [16, 8], strides = [1, 1]} : vector<16x32xbf16> to vector<16x8xbf16>
    %35 = vector.extract_strided_slice %32 {offsets = [0, 0], sizes = [16, 8], strides = [1, 1]} : vector<16x32xbf16> to vector<16x8xbf16>
    %36 = vector.extract_strided_slice %33 {offsets = [0, 0], sizes = [16, 8], strides = [1, 1]} : vector<16x32xbf16> to vector<16x8xbf16>
    "tpu.trace_start"() <{level = 10 : i32, message = "qd,kd->qk"}> : () -> ()
    %cst_26 = arith.constant dense<0.000000e+00> : vector<16x16xf32>
    %37 = tpu.matmul %34, %35, %cst_26 {dimension_numbers = #tpu.dot_dimension_numbers<[1], [1], [0], [0], [0, 0, 1, 0], [], []>} : vector<16x8xbf16>, vector<16x8xbf16>, vector<16x16xf32> -> vector<16x16xf32>
    "tpu.trace_stop"() : () -> ()
    %cst_27 = arith.constant 0.353553385 : f32
    %38 = vector.broadcast %cst_27 : f32 to vector<16x16xf32>
    %39 = arith.mulf %37, %38 : vector<16x16xf32>
    %cst_28 = arith.constant dense<0xFF800000> : vector<16xf32>
    %40 = vector.multi_reduction <maximumf>, %39, %cst_28 [1] : vector<16x16xf32> to vector<16xf32>
    %41 = vector.shape_cast %40 : vector<16xf32> to vector<16x1xf32>
    %42 = vector.broadcast %41 : vector<16x1xf32> to vector<16x16xf32>
    %43 = arith.subf %39, %42 : vector<16x16xf32>
    %44 = math.exp %43 : vector<16x16xf32>
    %cst_29 = arith.constant dense<0.000000e+00> : vector<16xf32>
    %45 = vector.multi_reduction <add>, %44, %cst_29 [1] : vector<16x16xf32> to vector<16xf32>
    %46 = vector.shape_cast %45 : vector<16xf32> to vector<16x1xf32>
    %47 = tpu.reciprocal %46 {approx = true} : vector<16x1xf32> -> vector<16x1xf32>
    %48 = vector.broadcast %47 : vector<16x1xf32> to vector<16x16xf32>
    %49 = arith.mulf %44, %48 : vector<16x16xf32>
    %50 = arith.truncf %49 : vector<16x16xf32> to vector<16x16xbf16>
    %cst_30 = arith.constant dense<0.000000e+00> : vector<16x8xf32>
    %51 = tpu.matmul %50, %36, %cst_30 {dimension_numbers = #tpu.dot_dimension_numbers<[1], [0], [0], [1], [0, 0, 1, 1], [], []>} : vector<16x16xbf16>, vector<16x8xbf16>, vector<16x8xf32> -> vector<16x8xf32>
    %c0_31 = arith.constant 0 : index
    %c0_32 = arith.constant 0 : index
    %52 = vector.load %arg23[%c0_31, %c0_32] : memref<16x32xf32, #tpu.memory_space<vmem>>, vector<16x8xf32>
    tpu.vector_store %arg23[%c0_31, %c0_32], %51 {strides = array<i32>} : memref<16x32xf32, #tpu.memory_space<vmem>>, vector<16x8xf32>,
    %53 = vector.extract_strided_slice %31 {offsets = [0, 8], sizes = [16, 8], strides = [1, 1]} : vector<16x32xbf16> to vector<16x8xbf16>
    %54 = vector.extract_strided_slice %32 {offsets = [0, 8], sizes = [16, 8], strides = [1, 1]} : vector<16x32xbf16> to vector<16x8xbf16>
    %55 = vector.extract_strided_slice %33 {offsets = [0, 8], sizes = [16, 8], strides = [1, 1]} : vector<16x32xbf16> to vector<16x8xbf16>
    "tpu.trace_start"() <{level = 10 : i32, message = "qd,kd->qk"}> : () -> ()
    %cst_33 = arith.constant dense<0.000000e+00> : vector<16x16xf32>
    %56 = tpu.matmul %53, %54, %cst_33 {dimension_numbers = #tpu.dot_dimension_numbers<[1], [1], [0], [0], [0, 0, 1, 0], [], []>} : vector<16x8xbf16>, vector<16x8xbf16>, vector<16x16xf32> -> vector<16x16xf32>
    "tpu.trace_stop"() : () -> ()
    %cst_34 = arith.constant 0.353553385 : f32
    %57 = vector.broadcast %cst_34 : f32 to vector<16x16xf32>
    %58 = arith.mulf %56, %57 : vector<16x16xf32>
    %cst_35 = arith.constant dense<0xFF800000> : vector<16xf32>
    %59 = vector.multi_reduction <maximumf>, %58, %cst_35 [1] : vector<16x16xf32> to vector<16xf32>
    %60 = vector.shape_cast %59 : vector<16xf32> to vector<16x1xf32>
    %61 = vector.broadcast %60 : vector<16x1xf32> to vector<16x16xf32>
    %62 = arith.subf %58, %61 : vector<16x16xf32>
    %63 = math.exp %62 : vector<16x16xf32>
    %cst_36 = arith.constant dense<0.000000e+00> : vector<16xf32>
    %64 = vector.multi_reduction <add>, %63, %cst_36 [1] : vector<16x16xf32> to vector<16xf32>
    %65 = vector.shape_cast %64 : vector<16xf32> to vector<16x1xf32>
    %66 = tpu.reciprocal %65 {approx = true} : vector<16x1xf32> -> vector<16x1xf32>
    %67 = vector.broadcast %66 : vector<16x1xf32> to vector<16x16xf32>
    %68 = arith.mulf %63, %67 : vector<16x16xf32>
    %69 = arith.truncf %68 : vector<16x16xf32> to vector<16x16xbf16>
    %cst_37 = arith.constant dense<0.000000e+00> : vector<16x8xf32>
    %70 = tpu.matmul %69, %55, %cst_37 {dimension_numbers = #tpu.dot_dimension_numbers<[1], [0], [0], [1], [0, 0, 1, 1], [], []>} : vector<16x16xbf16>, vector<16x8xbf16>, vector<16x8xf32> -> vector<16x8xf32>
    %c0_38 = arith.constant 0 : index
    %c8 = arith.constant 8 : index
    %71 = vector.load %arg23[%c0_38, %c8] : memref<16x32xf32, #tpu.memory_space<vmem>>, vector<16x8xf32>
    tpu.vector_store %arg23[%c0_38, %c8], %70 {strides = array<i32>} : memref<16x32xf32, #tpu.memory_space<vmem>>, vector<16x8xf32>,
    %72 = vector.extract_strided_slice %31 {offsets = [0, 16], sizes = [16, 8], strides = [1, 1]} : vector<16x32xbf16> to vector<16x8xbf16>
    %73 = vector.extract_strided_slice %32 {offsets = [0, 16], sizes = [16, 8], strides = [1, 1]} : vector<16x32xbf16> to vector<16x8xbf16>
    %74 = vector.extract_strided_slice %33 {offsets = [0, 16], sizes = [16, 8], strides = [1, 1]} : vector<16x32xbf16> to vector<16x8xbf16>
    "tpu.trace_start"() <{level = 10 : i32, message = "qd,kd->qk"}> : () -> ()
    %cst_39 = arith.constant dense<0.000000e+00> : vector<16x16xf32>
    %75 = tpu.matmul %72, %73, %cst_39 {dimension_numbers = #tpu.dot_dimension_numbers<[1], [1], [0], [0], [0, 0, 1, 0], [], []>} : vector<16x8xbf16>, vector<16x8xbf16>, vector<16x16xf32> -> vector<16x16xf32>
    "tpu.trace_stop"() : () -> ()
    %cst_40 = arith.constant 0.353553385 : f32
    %76 = vector.broadcast %cst_40 : f32 to vector<16x16xf32>
    %77 = arith.mulf %75, %76 : vector<16x16xf32>
    %cst_41 = arith.constant dense<0xFF800000> : vector<16xf32>
    %78 = vector.multi_reduction <maximumf>, %77, %cst_41 [1] : vector<16x16xf32> to vector<16xf32>
    %79 = vector.shape_cast %78 : vector<16xf32> to vector<16x1xf32>
    %80 = vector.broadcast %79 : vector<16x1xf32> to vector<16x16xf32>
    %81 = arith.subf %77, %80 : vector<16x16xf32>
    %82 = math.exp %81 : vector<16x16xf32>
    %cst_42 = arith.constant dense<0.000000e+00> : vector<16xf32>
    %83 = vector.multi_reduction <add>, %82, %cst_42 [1] : vector<16x16xf32> to vector<16xf32>
    %84 = vector.shape_cast %83 : vector<16xf32> to vector<16x1xf32>
    %85 = tpu.reciprocal %84 {approx = true} : vector<16x1xf32> -> vector<16x1xf32>
    %86 = vector.broadcast %85 : vector<16x1xf32> to vector<16x16xf32>
    %87 = arith.mulf %82, %86 : vector<16x16xf32>
    %88 = arith.truncf %87 : vector<16x16xf32> to vector<16x16xbf16>
    %cst_43 = arith.constant dense<0.000000e+00> : vector<16x8xf32>
    %89 = tpu.matmul %88, %74, %cst_43 {dimension_numbers = #tpu.dot_dimension_numbers<[1], [0], [0], [1], [0, 0, 1, 1], [], []>} : vector<16x16xbf16>, vector<16x8xbf16>, vector<16x8xf32> -> vector<16x8xf32>
    %c0_44 = arith.constant 0 : index
    %c16 = arith.constant 16 : index
    %90 = vector.load %arg23[%c0_44, %c16] : memref<16x32xf32, #tpu.memory_space<vmem>>, vector<16x8xf32>
    tpu.vector_store %arg23[%c0_44, %c16], %89 {strides = array<i32>} : memref<16x32xf32, #tpu.memory_space<vmem>>, vector<16x8xf32>,
    %91 = vector.extract_strided_slice %31 {offsets = [0, 24], sizes = [16, 8], strides = [1, 1]} : vector<16x32xbf16> to vector<16x8xbf16>
    %92 = vector.extract_strided_slice %32 {offsets = [0, 24], sizes = [16, 8], strides = [1, 1]} : vector<16x32xbf16> to vector<16x8xbf16>
    %93 = vector.extract_strided_slice %33 {offsets = [0, 24], sizes = [16, 8], strides = [1, 1]} : vector<16x32xbf16> to vector<16x8xbf16>
    "tpu.trace_start"() <{level = 10 : i32, message = "qd,kd->qk"}> : () -> ()
    %cst_45 = arith.constant dense<0.000000e+00> : vector<16x16xf32>
    %94 = tpu.matmul %91, %92, %cst_45 {dimension_numbers = #tpu.dot_dimension_numbers<[1], [1], [0], [0], [0, 0, 1, 0], [], []>} : vector<16x8xbf16>, vector<16x8xbf16>, vector<16x16xf32> -> vector<16x16xf32>
    "tpu.trace_stop"() : () -> ()
    %cst_46 = arith.constant 0.353553385 : f32
    %95 = vector.broadcast %cst_46 : f32 to vector<16x16xf32>
    %96 = arith.mulf %94, %95 : vector<16x16xf32>
    %cst_47 = arith.constant dense<0xFF800000> : vector<16xf32>
    %97 = vector.multi_reduction <maximumf>, %96, %cst_47 [1] : vector<16x16xf32> to vector<16xf32>
    %98 = vector.shape_cast %97 : vector<16xf32> to vector<16x1xf32>
    %99 = vector.broadcast %98 : vector<16x1xf32> to vector<16x16xf32>
    %100 = arith.subf %96, %99 : vector<16x16xf32>
    %101 = math.exp %100 : vector<16x16xf32>
    %cst_48 = arith.constant dense<0.000000e+00> : vector<16xf32>
    %102 = vector.multi_reduction <add>, %101, %cst_48 [1] : vector<16x16xf32> to vector<16xf32>
    %103 = vector.shape_cast %102 : vector<16xf32> to vector<16x1xf32>
    %104 = tpu.reciprocal %103 {approx = true} : vector<16x1xf32> -> vector<16x1xf32>
    %105 = vector.broadcast %104 : vector<16x1xf32> to vector<16x16xf32>
    %106 = arith.mulf %101, %105 : vector<16x16xf32>
    %107 = arith.truncf %106 : vector<16x16xf32> to vector<16x16xbf16>
    %cst_49 = arith.constant dense<0.000000e+00> : vector<16x8xf32>
    %108 = tpu.matmul %107, %93, %cst_49 {dimension_numbers = #tpu.dot_dimension_numbers<[1], [0], [0], [1], [0, 0, 1, 1], [], []>} : vector<16x16xbf16>, vector<16x8xbf16>, vector<16x8xf32> -> vector<16x8xf32>
    %c0_50 = arith.constant 0 : index
    %c24 = arith.constant 24 : index
    %109 = vector.load %arg23[%c0_50, %c24] : memref<16x32xf32, #tpu.memory_space<vmem>>, vector<16x8xf32>
    tpu.vector_store %arg23[%c0_50, %c24], %108 {strides = array<i32>} : memref<16x32xf32, #tpu.memory_space<vmem>>, vector<16x8xf32>,
    %c0_51 = arith.constant 0 : index
    %c0_52 = arith.constant 0 : index
    %110 = vector.load %arg23[%c0_51, %c0_52] : memref<16x32xf32, #tpu.memory_space<vmem>>, vector<16x32xf32>
    %111 = arith.truncf %110 : vector<16x32xf32> to vector<16x32xbf16>
    %c0_53 = arith.constant 0 : index
    %c0_54 = arith.constant 0 : index
    %c0_55 = arith.constant 0 : index
    %112 = vector.load %arg10[%c0_53, %c0_54, %c0_55] : memref<1x32x32xbf16, #tpu.memory_space<vmem>>, vector<1x32x32xbf16>
    %113 = vector.shape_cast %112 : vector<1x32x32xbf16> to vector<32x32xbf16>
    %cst_56 = arith.constant dense<0.000000e+00> : vector<16x32xf32>
    %114 = tpu.matmul %111, %113, %cst_56 {dimension_numbers = #tpu.dot_dimension_numbers<[1], [0], [0], [1], [0, 0, 1, 1], [], []>} : vector<16x32xbf16>, vector<32x32xbf16>, vector<16x32xf32> -> vector<16x32xf32>
    %c0_57 = arith.constant 0 : index
    %c0_58 = arith.constant 0 : index
    %c0_59 = arith.constant 0 : index
    %115 = vector.load %arg11[%c0_57, %c0_58, %c0_59] : memref<1x1x32xf32, #tpu.memory_space<vmem>>, vector<1x1x32xf32>
    %116 = vector.shape_cast %115 : vector<1x1x32xf32> to vector<1x32xf32>
    %117 = vector.broadcast %116 : vector<1x32xf32> to vector<16x32xf32>
    %118 = arith.addf %114, %117 : vector<16x32xf32>
    %119 = arith.addf %4, %118 : vector<16x32xf32>
    %c0_60 = arith.constant 0 : index
    %c0_61 = arith.constant 0 : index
    %c0_62 = arith.constant 0 : index
    %120 = vector.load %arg16[%c0_60, %c0_61, %c0_62] : memref<1x1x32xf32, #tpu.memory_space<vmem>>, vector<1x1x32xf32>
    %121 = vector.shape_cast %120 : vector<1x1x32xf32> to vector<1x32xf32>
    %c0_63 = arith.constant 0 : index
    %c0_64 = arith.constant 0 : index
    %c0_65 = arith.constant 0 : index
    %122 = vector.load %arg17[%c0_63, %c0_64, %c0_65] : memref<1x1x32xf32, #tpu.memory_space<vmem>>, vector<1x1x32xf32>
    %123 = vector.shape_cast %122 : vector<1x1x32xf32> to vector<1x32xf32>
    %cst_66 = arith.constant dense<0.000000e+00> : vector<16xf32>
    %124 = vector.multi_reduction <add>, %119, %cst_66 [1] : vector<16x32xf32> to vector<16xf32>
    %125 = vector.shape_cast %124 : vector<16xf32> to vector<16x1xf32>
    %cst_67 = arith.constant 3.200000e+01 : f32
    %126 = vector.broadcast %cst_67 : f32 to vector<16x1xf32>
    %127 = arith.divf %125, %126 : vector<16x1xf32>
    %128 = vector.broadcast %127 : vector<16x1xf32> to vector<16x32xf32>
    %129 = arith.subf %119, %128 : vector<16x32xf32>
    %130 = arith.mulf %129, %129 : vector<16x32xf32>
    %cst_68 = arith.constant dense<0.000000e+00> : vector<16xf32>
    %131 = vector.multi_reduction <add>, %130, %cst_68 [1] : vector<16x32xf32> to vector<16xf32>
    %132 = vector.shape_cast %131 : vector<16xf32> to vector<16x1xf32>
    %cst_69 = arith.constant 3.200000e+01 : f32
    %133 = vector.broadcast %cst_69 : f32 to vector<16x1xf32>
    %134 = arith.divf %132, %133 : vector<16x1xf32>
    %cst_70 = arith.constant 9.99999974E-6 : f32
    %135 = vector.broadcast %cst_70 : f32 to vector<16x1xf32>
    %136 = arith.addf %134, %135 : vector<16x1xf32>
    %137 = math.rsqrt %136 : vector<16x1xf32>
    %138 = vector.broadcast %137 : vector<16x1xf32> to vector<16x32xf32>
    %139 = arith.mulf %129, %138 : vector<16x32xf32>
    %140 = vector.broadcast %121 : vector<1x32xf32> to vector<16x32xf32>
    %141 = arith.mulf %139, %140 : vector<16x32xf32>
    %142 = vector.broadcast %123 : vector<1x32xf32> to vector<16x32xf32>
    %143 = arith.addf %141, %142 : vector<16x32xf32>
    %144 = arith.truncf %143 : vector<16x32xf32> to vector<16x32xbf16>
    %c0_71 = arith.constant 0 : index
    %c0_72 = arith.constant 0 : index
    %c0_73 = arith.constant 0 : index
    %145 = vector.load %arg12[%c0_71, %c0_72, %c0_73] : memref<1x32x64xbf16, #tpu.memory_space<vmem>>, vector<1x32x64xbf16>
    %146 = vector.shape_cast %145 : vector<1x32x64xbf16> to vector<32x64xbf16>
    %cst_74 = arith.constant dense<0.000000e+00> : vector<16x64xf32>
    %147 = tpu.matmul %144, %146, %cst_74 {dimension_numbers = #tpu.dot_dimension_numbers<[1], [0], [0], [1], [0, 0, 1, 1], [], []>} : vector<16x32xbf16>, vector<32x64xbf16>, vector<16x64xf32> -> vector<16x64xf32>
    %c0_75 = arith.constant 0 : index
    %c0_76 = arith.constant 0 : index
    %c0_77 = arith.constant 0 : index
    %148 = vector.load %arg13[%c0_75, %c0_76, %c0_77] : memref<1x1x64xf32, #tpu.memory_space<vmem>>, vector<1x1x64xf32>
    %149 = vector.shape_cast %148 : vector<1x1x64xf32> to vector<1x64xf32>
    %150 = vector.broadcast %149 : vector<1x64xf32> to vector<16x64xf32>
    %151 = arith.addf %147, %150 : vector<16x64xf32>
    %cst_78 = arith.constant 0.000000e+00 : f32
    %152 = vector.broadcast %cst_78 : f32 to vector<16x64xf32>
    %153 = arith.maximumf %151, %152 : vector<16x64xf32>
    %154 = arith.truncf %153 : vector<16x64xf32> to vector<16x64xbf16>
    %c0_79 = arith.constant 0 : index
    %c0_80 = arith.constant 0 : index
    %c0_81 = arith.constant 0 : index
    %155 = vector.load %arg14[%c0_79, %c0_80, %c0_81] : memref<1x64x32xbf16, #tpu.memory_space<vmem>>, vector<1x64x32xbf16>
    %156 = vector.shape_cast %155 : vector<1x64x32xbf16> to vector<64x32xbf16>
    %cst_82 = arith.constant dense<0.000000e+00> : vector<16x32xf32>
    %157 = tpu.matmul %154, %156, %cst_82 {dimension_numbers = #tpu.dot_dimension_numbers<[1], [0], [0], [1], [0, 0, 1, 1], [], []>} : vector<16x64xbf16>, vector<64x32xbf16>, vector<16x32xf32> -> vector<16x32xf32>
    %c0_83 = arith.constant 0 : index
    %c0_84 = arith.constant 0 : index
    %c0_85 = arith.constant 0 : index
    %158 = vector.load %arg15[%c0_83, %c0_84, %c0_85] : memref<1x1x32xf32, #tpu.memory_space<vmem>>, vector<1x1x32xf32>
    %159 = vector.shape_cast %158 : vector<1x1x32xf32> to vector<1x32xf32>
    %160 = vector.broadcast %159 : vector<1x32xf32> to vector<16x32xf32>
    %161 = arith.addf %157, %160 : vector<16x32xf32>
    %162 = arith.addf %143, %161 : vector<16x32xf32>
    %c0_86 = arith.constant 0 : index
    %c0_87 = arith.constant 0 : index
    %c0_88 = arith.constant 0 : index
    %163 = vector.load %arg18[%c0_86, %c0_87, %c0_88] : memref<1x1x32xf32, #tpu.memory_space<vmem>>, vector<1x1x32xf32>
    %164 = vector.shape_cast %163 : vector<1x1x32xf32> to vector<1x32xf32>
    %c0_89 = arith.constant 0 : index
    %c0_90 = arith.constant 0 : index
    %c0_91 = arith.constant 0 : index
    %165 = vector.load %arg19[%c0_89, %c0_90, %c0_91] : memref<1x1x32xf32, #tpu.memory_space<vmem>>, vector<1x1x32xf32>
    %166 = vector.shape_cast %165 : vector<1x1x32xf32> to vector<1x32xf32>
    %cst_92 = arith.constant dense<0.000000e+00> : vector<16xf32>
    %167 = vector.multi_reduction <add>, %162, %cst_92 [1] : vector<16x32xf32> to vector<16xf32>
    %168 = vector.shape_cast %167 : vector<16xf32> to vector<16x1xf32>
    %cst_93 = arith.constant 3.200000e+01 : f32
    %169 = vector.broadcast %cst_93 : f32 to vector<16x1xf32>
    %170 = arith.divf %168, %169 : vector<16x1xf32>
    %171 = vector.broadcast %170 : vector<16x1xf32> to vector<16x32xf32>
    %172 = arith.subf %162, %171 : vector<16x32xf32>
    %173 = arith.mulf %172, %172 : vector<16x32xf32>
    %cst_94 = arith.constant dense<0.000000e+00> : vector<16xf32>
    %174 = vector.multi_reduction <add>, %173, %cst_94 [1] : vector<16x32xf32> to vector<16xf32>
    %175 = vector.shape_cast %174 : vector<16xf32> to vector<16x1xf32>
    %cst_95 = arith.constant 3.200000e+01 : f32
    %176 = vector.broadcast %cst_95 : f32 to vector<16x1xf32>
    %177 = arith.divf %175, %176 : vector<16x1xf32>
    %cst_96 = arith.constant 9.99999974E-6 : f32
    %178 = vector.broadcast %cst_96 : f32 to vector<16x1xf32>
    %179 = arith.addf %177, %178 : vector<16x1xf32>
    %180 = math.rsqrt %179 : vector<16x1xf32>
    %181 = vector.broadcast %180 : vector<16x1xf32> to vector<16x32xf32>
    %182 = arith.mulf %172, %181 : vector<16x32xf32>
    %183 = vector.broadcast %164 : vector<1x32xf32> to vector<16x32xf32>
    %184 = arith.mulf %182, %183 : vector<16x32xf32>
    %185 = vector.broadcast %166 : vector<1x32xf32> to vector<16x32xf32>
    %186 = arith.addf %184, %185 : vector<16x32xf32>
    %c0_97 = arith.constant 0 : index
    %c0_98 = arith.constant 0 : index
    %c0_99 = arith.constant 0 : index
    %187 = vector.load %arg22[%c0_97, %c0_98, %c0_99] : memref<1x16x32xf32, #tpu.memory_space<vmem>>, vector<1x16x32xf32>
    %188 = vector.shape_cast %187 : vector<1x16x32xf32> to vector<16x32xf32>
    %189 = vector.shape_cast %186 : vector<16x32xf32> to vector<1x16x32xf32>
    tpu.vector_store %arg22[%c0_97, %c0_98, %c0_99], %189 {strides = array<i32>} : memref<1x16x32xf32, #tpu.memory_space<vmem>>, vector<1x16x32xf32>,
    %c1_i32 = arith.constant 1 : i32
    %190 = arith.cmpi eq, %arg1, %c1_i32 : i32
    %191 = arith.extui %190 : i1 to i32
    %c0_i32_100 = arith.constant 0 : i32
    %192 = arith.cmpi ne, %191, %c0_i32_100 : i32
    scf.if %192 {
      %c0_101 = arith.constant 0 : index
      %c0_102 = arith.constant 0 : index
      %193 = vector.load %arg20[%c0_101, %c0_102] : memref<1x32xf32, #tpu.memory_space<vmem>>, vector<1x32xf32>
      %c0_103 = arith.constant 0 : index
      %c0_104 = arith.constant 0 : index
      %194 = vector.load %arg21[%c0_103, %c0_104] : memref<1x32xf32, #tpu.memory_space<vmem>>, vector<1x32xf32>
      %cst_105 = arith.constant dense<0.000000e+00> : vector<16xf32>
      %195 = vector.multi_reduction <add>, %186, %cst_105 [1] : vector<16x32xf32> to vector<16xf32>
      %196 = vector.shape_cast %195 : vector<16xf32> to vector<16x1xf32>
      %cst_106 = arith.constant 3.200000e+01 : f32
      %197 = vector.broadcast %cst_106 : f32 to vector<16x1xf32>
      %198 = arith.divf %196, %197 : vector<16x1xf32>
      %199 = vector.broadcast %198 : vector<16x1xf32> to vector<16x32xf32>
      %200 = arith.subf %186, %199 : vector<16x32xf32>
      %201 = arith.mulf %200, %200 : vector<16x32xf32>
      %cst_107 = arith.constant dense<0.000000e+00> : vector<16xf32>
      %202 = vector.multi_reduction <add>, %201, %cst_107 [1] : vector<16x32xf32> to vector<16xf32>
      %203 = vector.shape_cast %202 : vector<16xf32> to vector<16x1xf32>
      %cst_108 = arith.constant 3.200000e+01 : f32
      %204 = vector.broadcast %cst_108 : f32 to vector<16x1xf32>
      %205 = arith.divf %203, %204 : vector<16x1xf32>
      %cst_109 = arith.constant 9.99999974E-6 : f32
      %206 = vector.broadcast %cst_109 : f32 to vector<16x1xf32>
      %207 = arith.addf %205, %206 : vector<16x1xf32>
      %208 = math.rsqrt %207 : vector<16x1xf32>
      %209 = vector.broadcast %208 : vector<16x1xf32> to vector<16x32xf32>
      %210 = arith.mulf %200, %209 : vector<16x32xf32>
      %211 = vector.broadcast %193 : vector<1x32xf32> to vector<16x32xf32>
      %212 = arith.mulf %210, %211 : vector<16x32xf32>
      %213 = vector.broadcast %194 : vector<1x32xf32> to vector<16x32xf32>
      %214 = arith.addf %212, %213 : vector<16x32xf32>
      %c0_110 = arith.constant 0 : index
      %c0_111 = arith.constant 0 : index
      %c0_112 = arith.constant 0 : index
      %215 = vector.load %arg22[%c0_110, %c0_111, %c0_112] : memref<1x16x32xf32, #tpu.memory_space<vmem>>, vector<1x16x32xf32>
      %216 = vector.shape_cast %215 : vector<1x16x32xf32> to vector<16x32xf32>
      %217 = vector.shape_cast %214 : vector<16x32xf32> to vector<1x16x32xf32>
      tpu.vector_store %arg22[%c0_110, %c0_111, %c0_112], %217 {strides = array<i32>} : memref<1x16x32xf32, #tpu.memory_space<vmem>>, vector<1x16x32xf32>,
    } else {
    }
    return
  }
  func.func @transform_0(%arg0: i32, %arg1: i32) -> (i32, i32, i32) {
    %c0_i32 = arith.constant 0 : i32
    %c0_i32_0 = arith.constant 0 : i32
    %c0_i32_1 = arith.constant 0 : i32
    return %arg0, %c0_i32, %c0_i32_0 : i32, i32, i32
  }
  func.func @transform_1(%arg0: i32, %arg1: i32) -> (i32, i32, i32) {
    %c0_i32 = arith.constant 0 : i32
    %c0_i32_0 = arith.constant 0 : i32
    %c0_i32_1 = arith.constant 0 : i32
    return %arg0, %c0_i32, %c0_i32_0 : i32, i32, i32
  }
  func.func @transform_2(%arg0: i32, %arg1: i32) -> (i32, i32, i32) {
    %c0_i32 = arith.constant 0 : i32
    %c0_i32_0 = arith.constant 0 : i32
    %c0_i32_1 = arith.constant 0 : i32
    return %arg1, %c0_i32, %c0_i32_0 : i32, i32, i32
  }
  func.func @transform_3(%arg0: i32, %arg1: i32) -> (i32, i32, i32) {
    %c0_i32 = arith.constant 0 : i32
    %c0_i32_0 = arith.constant 0 : i32
    %c0_i32_1 = arith.constant 0 : i32
    return %arg1, %c0_i32, %c0_i32_0 : i32, i32, i32
  }
  func.func @transform_4(%arg0: i32, %arg1: i32) -> (i32, i32, i32) {
    %c0_i32 = arith.constant 0 : i32
    %c0_i32_0 = arith.constant 0 : i32
    %c0_i32_1 = arith.constant 0 : i32
    return %arg1, %c0_i32, %c0_i32_0 : i32, i32, i32
  }
  func.func @transform_5(%arg0: i32, %arg1: i32) -> (i32, i32, i32) {
    %c0_i32 = arith.constant 0 : i32
    %c0_i32_0 = arith.constant 0 : i32
    %c0_i32_1 = arith.constant 0 : i32
    return %arg1, %c0_i32, %c0_i32_0 : i32, i32, i32
  }
  func.func @transform_6(%arg0: i32, %arg1: i32) -> (i32, i32, i32) {
    %c0_i32 = arith.constant 0 : i32
    %c0_i32_0 = arith.constant 0 : i32
    %c0_i32_1 = arith.constant 0 : i32
    return %arg1, %c0_i32, %c0_i32_0 : i32, i32, i32
  }
  func.func @transform_7(%arg0: i32, %arg1: i32) -> (i32, i32, i32) {
    %c0_i32 = arith.constant 0 : i32
    %c0_i32_0 = arith.constant 0 : i32
    %c0_i32_1 = arith.constant 0 : i32
    return %arg1, %c0_i32, %c0_i32_0 : i32, i32, i32
  }
  func.func @transform_8(%arg0: i32, %arg1: i32) -> (i32, i32, i32) {
    %c0_i32 = arith.constant 0 : i32
    %c0_i32_0 = arith.constant 0 : i32
    %c0_i32_1 = arith.constant 0 : i32
    return %arg1, %c0_i32, %c0_i32_0 : i32, i32, i32
  }
  func.func @transform_9(%arg0: i32, %arg1: i32) -> (i32, i32, i32) {
    %c0_i32 = arith.constant 0 : i32
    %c0_i32_0 = arith.constant 0 : i32
    %c0_i32_1 = arith.constant 0 : i32
    return %arg1, %c0_i32, %c0_i32_0 : i32, i32, i32
  }
  func.func @transform_10(%arg0: i32, %arg1: i32) -> (i32, i32, i32) {
    %c0_i32 = arith.constant 0 : i32
    %c0_i32_0 = arith.constant 0 : i32
    %c0_i32_1 = arith.constant 0 : i32
    return %arg1, %c0_i32, %c0_i32_0 : i32, i32, i32
  }
  func.func @transform_11(%arg0: i32, %arg1: i32) -> (i32, i32, i32) {
    %c0_i32 = arith.constant 0 : i32
    %c0_i32_0 = arith.constant 0 : i32
    %c0_i32_1 = arith.constant 0 : i32
    return %arg1, %c0_i32, %c0_i32_0 : i32, i32, i32
  }
  func.func @transform_12(%arg0: i32, %arg1: i32) -> (i32, i32, i32) {
    %c0_i32 = arith.constant 0 : i32
    %c0_i32_0 = arith.constant 0 : i32
    %c0_i32_1 = arith.constant 0 : i32
    return %arg1, %c0_i32, %c0_i32_0 : i32, i32, i32
  }
  func.func @transform_13(%arg0: i32, %arg1: i32) -> (i32, i32, i32) {
    %c0_i32 = arith.constant 0 : i32
    %c0_i32_0 = arith.constant 0 : i32
    %c0_i32_1 = arith.constant 0 : i32
    return %arg1, %c0_i32, %c0_i32_0 : i32, i32, i32
  }
  func.func @transform_14(%arg0: i32, %arg1: i32) -> (i32, i32, i32) {
    %c0_i32 = arith.constant 0 : i32
    %c0_i32_0 = arith.constant 0 : i32
    %c0_i32_1 = arith.constant 0 : i32
    return %arg1, %c0_i32, %c0_i32_0 : i32, i32, i32
  }
  func.func @transform_15(%arg0: i32, %arg1: i32) -> (i32, i32, i32) {
    %c0_i32 = arith.constant 0 : i32
    %c0_i32_0 = arith.constant 0 : i32
    %c0_i32_1 = arith.constant 0 : i32
    return %arg1, %c0_i32, %c0_i32_0 : i32, i32, i32
  }
  func.func @transform_16(%arg0: i32, %arg1: i32) -> (i32, i32, i32) {
    %c0_i32 = arith.constant 0 : i32
    %c0_i32_0 = arith.constant 0 : i32
    %c0_i32_1 = arith.constant 0 : i32
    return %arg1, %c0_i32, %c0_i32_0 : i32, i32, i32
  }
  func.func @transform_17(%arg0: i32, %arg1: i32) -> (i32, i32, i32) {
    %c0_i32 = arith.constant 0 : i32
    %c0_i32_0 = arith.constant 0 : i32
    %c0_i32_1 = arith.constant 0 : i32
    return %arg1, %c0_i32, %c0_i32_0 : i32, i32, i32
  }
  func.func @transform_18(%arg0: i32, %arg1: i32) -> (i32, i32) {
    %c0_i32 = arith.constant 0 : i32
    %c0_i32_0 = arith.constant 0 : i32
    %c0_i32_1 = arith.constant 0 : i32
    return %c0_i32, %c0_i32_0 : i32, i32
  }
  func.func @transform_19(%arg0: i32, %arg1: i32) -> (i32, i32) {
    %c0_i32 = arith.constant 0 : i32
    %c0_i32_0 = arith.constant 0 : i32
    %c0_i32_1 = arith.constant 0 : i32
    return %c0_i32, %c0_i32_0 : i32, i32
  }
  func.func @transform_20(%arg0: i32, %arg1: i32) -> (i32, i32, i32) {
    %c0_i32 = arith.constant 0 : i32
    %c0_i32_0 = arith.constant 0 : i32
    %c0_i32_1 = arith.constant 0 : i32
    return %arg0, %c0_i32, %c0_i32_0 : i32, i32, i32
  }
}

</mosaic_0001>

<llo_original>
// kernel: tpu_custom_call.1
$region0: #{tpu_custom_call.1}
  #allocation0 [shape = 'u32[]', space=smem, size = 0x4, offset = 0x4, fixed_abs, tag = 'smem constant byte address 0x4 - core index']
  #allocation1 [shape = 'u32[144,128]{1,0:T(1,128)}', space=vmem, size = 0x12000, scoped, tag = 'internal scratch']
  #allocation2 [shape = 'f32[16,32]{1,0:T(8,128)}', space=vmem, size = 0x2000, scoped, tag = 'scratch operand']
  %s0 = inlined_call_operand.vmem [shape: f32[2,16,32], index: 0, kind: input, shape index: {}]
  %s1 = inlined_call_operand.vmem [shape: f32[2,16,32], index: 1, kind: input, shape index: {}]
  %s2 = inlined_call_operand.vmem [shape: bf16[2,32,32], index: 2, kind: input, shape index: {}]
  %s3 = inlined_call_operand.hbm [shape: bf16[2,32,32], index: 3, kind: input, shape index: {}]
  %s4 = inlined_call_operand.hbm [shape: bf16[2,32,32], index: 4, kind: input, shape index: {}]
  %s5 = inlined_call_operand.vmem [shape: f32[2,1,32], index: 5, kind: input, shape index: {}]
  %s6 = inlined_call_operand.vmem [shape: f32[2,1,32], index: 6, kind: input, shape index: {}]
  %s7 = inlined_call_operand.vmem [shape: f32[2,1,32], index: 7, kind: input, shape index: {}]
  %s8 = inlined_call_operand.hbm [shape: bf16[2,32,32], index: 8, kind: input, shape index: {}]
  %s9 = inlined_call_operand.vmem [shape: f32[2,1,32], index: 9, kind: input, shape index: {}]
  %s10 = inlined_call_operand.hbm [shape: bf16[2,32,64], index: 10, kind: input, shape index: {}]
  %s11 = inlined_call_operand.vmem [shape: f32[2,1,64], index: 11, kind: input, shape index: {}]
  %s12 = inlined_call_operand.vmem [shape: bf16[2,64,32], index: 12, kind: input, shape index: {}]
  %s13 = inlined_call_operand.vmem [shape: f32[2,1,32], index: 13, kind: input, shape index: {}]
  %s14 = inlined_call_operand.vmem [shape: f32[2,1,32], index: 14, kind: input, shape index: {}]
  %s15 = inlined_call_operand.vmem [shape: f32[2,1,32], index: 15, kind: input, shape index: {}]
  %s16 = inlined_call_operand.vmem [shape: f32[2,1,32], index: 16, kind: input, shape index: {}]
  %s17 = inlined_call_operand.vmem [shape: f32[2,1,32], index: 17, kind: input, shape index: {}]
  %s18 = inlined_call_operand.vmem [shape: f32[1,32], index: 18, kind: input, shape index: {}]
  %s19 = inlined_call_operand.vmem [shape: f32[1,32], index: 19, kind: input, shape index: {}]
  %s20 = inlined_call_operand.hbm [shape: f32[2,16,32], index: 20, kind: output, shape index: {}]
  %s21 = sld [smem:[#allocation0]]
  $region137: #{tpu_custom_call.1} parent=0
    _
  %s23 = ssub.s32 1, %s21
  %s24 = scalar_select 0, %s23, %s21
  $region1: #{tpu_custom_call.1} parent=0
    #allocation3 [shape = 'u8[16384]{0}', space=vmem, size = 0x4000, scoped, tag = 'input window, operand 3']
    #allocation4 [shape = 's32[2]{0}', space=sflag, size = 0x8, scoped, tag = 'scoped memory for tpu_custom_call.1']
    #allocation5 [shape = 's32[2]{0}', space=sflag, size = 0x8, scoped, tag = 'scoped memory for tpu_custom_call.1']
    #allocation6 [shape = 'u8[16384]{0}', space=vmem, size = 0x4000, scoped, tag = 'input window, operand 4']
    #allocation7 [shape = 's32[2]{0}', space=sflag, size = 0x8, scoped, tag = 'scoped memory for tpu_custom_call.1']
    #allocation8 [shape = 'u8[16384]{0}', space=vmem, size = 0x4000, scoped, tag = 'input window, operand 8']
    #allocation9 [shape = 'u8[16384]{0}', space=vmem, size = 0x4000, scoped, tag = 'input window, operand 10']
    #allocation10 [shape = 's32[2]{0}', space=sflag, size = 0x8, scoped, tag = 'scoped memory for tpu_custom_call.1']
    #allocation11 [shape = 'u8[16384]{0}', space=vmem, size = 0x4000, scoped, tag = 'output window, operand 0']
    %25 = vsyncpa [#allocation4], 0
    %s26 = scalar_lea.sflag [#allocation4], 1
    %27 = vsyncpa %s26, 0
    %28 = vsyncpa [#allocation7], 0
    %s29 = scalar_lea.sflag [#allocation7], 1
    %30 = vsyncpa %s29, 0
    %31 = vsyncpa [#allocation10], 0
    %s32 = scalar_lea.sflag [#allocation10], 1
    %33 = vsyncpa %s32, 0
    %34 = vsyncpa [#allocation5], 0
    %s35 = scalar_lea.sflag [#allocation5], 1
    %36 = vsyncpa %s35, 0
    loop: start=0, step=1, limit=6
    $region2: #{tpu_custom_call.1} parent=1 // loop_pre_header
      _
    $region3: #{tpu_custom_call.1} parent=1 // loop_header
      %s38 = sphi 0, %s42
      %p39 = scmp.ge.s32.totalorder %s38, 6
      %s45 = sphi 0, %s57
      %s46 = sphi 0, %s53
      %s47 = sphi 0, %s45
      %s48 = sphi 0, %s46
      %s49 = sphi 0, %s47
      %s50 = sphi 0, %s48
      %s60 = sphi 0, %s62
      %s63 = sphi 0, %s60
      %s64 = sphi 0, %s63
      %s80 = sphi 0, %s64
      %s86 = sphi 0, %s88
      %s89 = sphi 0, %s86
      %s90 = sphi 0, %s89
      %s106 = sphi 0, %s90
      %s112 = sphi 0, %s114
      %s115 = sphi 0, %s112
      %s116 = sphi 0, %s115
      %s132 = sphi 0, %s116
      %s138 = sphi 0, %s140
      %s141 = sphi 0, %s138
      %s142 = sphi 0, %s141
      %s158 = sphi 0, %s142
      %s164 = sphi 0, %s166
      %s167 = sphi 0, %s164
      %s168 = sphi 0, %s167
      %s184 = sphi 0, %s168
      %s190 = sphi 0, %s192
      %s193 = sphi 0, %s190
      %s194 = sphi 0, %s193
      %s210 = sphi 0, %s194
      %s216 = sphi 0, %s218
      %s219 = sphi 0, %s216
      %s220 = sphi 0, %s219
      %s236 = sphi 0, %s220
      %s242 = sphi 0, %s244
      %s245 = sphi 0, %s242
      %s246 = sphi 0, %s245
      %s262 = sphi 0, %s246
      %s268 = sphi 0, %s270
      %s271 = sphi 0, %s268
      %s272 = sphi 0, %s271
      %s288 = sphi 0, %s272
      %s294 = sphi 0, %s296
      %s297 = sphi 0, %s294
      %s298 = sphi 0, %s297
      %s314 = sphi 0, %s298
      %s320 = sphi 0, %s322
      %s323 = sphi 0, %s320
      %s324 = sphi 0, %s323
      %s340 = sphi 0, %s324
      %s346 = sphi 0, %s348
      %s349 = sphi 0, %s346
      %s350 = sphi 0, %s349
      %s366 = sphi 0, %s350
      %s372 = sphi 0, %s374
      %s375 = sphi 0, %s372
      %s376 = sphi 0, %s375
      %s392 = sphi 0, %s376
      %s398 = sphi 0, %s400
      %s401 = sphi 0, %s398
      %s402 = sphi 0, %s401
      %s418 = sphi 0, %s402
      %s424 = sphi 0, %s426
      %s427 = sphi 0, %s424
      %s428 = sphi 0, %s427
      %s444 = sphi 0, %s428
      %s450 = sphi 0, %s452
      %s453 = sphi 0, %s450
      %s454 = sphi 0, %s453
      %s470 = sphi 0, %s454
      %s476 = sphi 0, %s478
      %s479 = sphi 0, %s476
      %s480 = sphi 0, %s479
      %s496 = sphi 0, %s480
      %s502 = sphi 0, %s504
      %s505 = sphi 0, %s502
      %s506 = sphi 0, %s505
      %s522 = sphi 0, %s506
      %s526 = sphi 0, %s526
      %s528 = sphi 0, %s526
      %s529 = sphi 0, %s528
      %s543 = sphi 0, %s529
      %s547 = sphi 0, %s547
      %s549 = sphi 0, %s547
      %s550 = sphi 0, %s549
      %s564 = sphi 0, %s550
      %s570 = sphi 0, %s572
      %s573 = sphi 0, %s570
      %s574 = sphi 0, %s573
      %s590 = sphi 0, %s574
    $region4: #{tpu_custom_call.1} parent=1 // loop_header_branch
      %41 = sbr.rel (%p39) target = $region8
    $region5: #{tpu_custom_call.1} parent=1 // loop_body
      %s43 = ssub.s32 %s38, 1
      %s44 = ssub.s32 %s38, 2
      %s51 = sadd.s32 1, %s46
      %p52 = scmp.ge.s32.totalorder %s51, 2
      %s53 = scalar_select %p52, 0, %s51
      %s54 = sadd.s32 1, %s45
      %s55 = scalar_select %p52, %s54, %s45
      %p56 = scmp.ge.s32.totalorder %s55, 2
      %s57 = scalar_select %p56, 0, %s55
      %s58 = ssub.s32 %s45, %s57
      %p59 = scmp.eq.s32.totalorder %s58, 0
      %s61 = sadd.s32 %s60, 1
      %s62 = scalar_select %p59, %s60, %s61
      %p65 = pneg %p59
      %p66 = scmp.eq.s32.totalorder %s38, 3
      %p67 = por %p65, %p66
      %p68 = scmp.ne.s32.totalorder %s60, %s63
      %p69 = scmp.eq.s32.totalorder %s38, 0
      %p70 = por %p68, %p69
      %p71 = scmp.ne.s32.totalorder %s60, %s63
      %p72 = scmp.eq.s32.totalorder %s43, 3
      %p73 = por %p71, %p72
      %p74 = scmp.ne.s32.totalorder %s63, %s64
      %p75 = scmp.eq.s32.totalorder %s43, 0
      %p76 = por %p74, %p75
      %p77 = scmp.ne.s32.totalorder %s63, %s64
      %p78 = scmp.eq.s32.totalorder %s44, 3
      %p79 = por %p77, %p78
      %p81 = scmp.ne.s32.totalorder %s64, %s80
      %p82 = scmp.eq.s32.totalorder %s44, 0
      %p83 = por %p81, %p82
      %s84 = ssub.s32 %s45, %s57
      %p85 = scmp.eq.s32.totalorder %s84, 0
      %s87 = sadd.s32 %s86, 1
      %s88 = scalar_select %p85, %s86, %s87
      %p91 = pneg %p85
      %p92 = scmp.eq.s32.totalorder %s38, 3
      %p93 = por %p91, %p92
      %p94 = scmp.ne.s32.totalorder %s86, %s89
      %p95 = scmp.eq.s32.totalorder %s38, 0
      %p96 = por %p94, %p95
      %p97 = scmp.ne.s32.totalorder %s86, %s89
      %p98 = scmp.eq.s32.totalorder %s43, 3
      %p99 = por %p97, %p98
      %p100 = scmp.ne.s32.totalorder %s89, %s90
      %p101 = scmp.eq.s32.totalorder %s43, 0
      %p102 = por %p100, %p101
      %p103 = scmp.ne.s32.totalorder %s89, %s90
      %p104 = scmp.eq.s32.totalorder %s44, 3
      %p105 = por %p103, %p104
      %p107 = scmp.ne.s32.totalorder %s90, %s106
      %p108 = scmp.eq.s32.totalorder %s44, 0
      %p109 = por %p107, %p108
      %s110 = ssub.s32 %s46, %s53
      %p111 = scmp.eq.s32.totalorder %s110, 0
      %s113 = sadd.s32 %s112, 1
      %s114 = scalar_select %p111, %s112, %s113
      %p117 = pneg %p111
      %p118 = scmp.eq.s32.totalorder %s38, 3
      %p119 = por %p117, %p118
      %p120 = scmp.ne.s32.totalorder %s112, %s115
      %p121 = scmp.eq.s32.totalorder %s38, 0
      %p122 = por %p120, %p121
      %p123 = scmp.ne.s32.totalorder %s112, %s115
      %p124 = scmp.eq.s32.totalorder %s43, 3
      %p125 = por %p123, %p124
      %p126 = scmp.ne.s32.totalorder %s115, %s116
      %p127 = scmp.eq.s32.totalorder %s43, 0
      %p128 = por %p126, %p127
      %p129 = scmp.ne.s32.totalorder %s115, %s116
      %p130 = scmp.eq.s32.totalorder %s44, 3
      %p131 = por %p129, %p130
      %p133 = scmp.ne.s32.totalorder %s116, %s132
      %p134 = scmp.eq.s32.totalorder %s44, 0
      %p135 = por %p133, %p134
      %s136 = ssub.s32 %s46, %s53
      %p137 = scmp.eq.s32.totalorder %s136, 0
      %s139 = sadd.s32 %s138, 1
      %s140 = scalar_select %p137, %s138, %s139
      %p143 = pneg %p137
      %p144 = scmp.eq.s32.totalorder %s38, 3
      %p145 = por %p143, %p144
      %p146 = scmp.ne.s32.totalorder %s138, %s141
      %p147 = scmp.eq.s32.totalorder %s38, 0
      %p148 = por %p146, %p147
      %p149 = scmp.ne.s32.totalorder %s138, %s141
      %p150 = scmp.eq.s32.totalorder %s43, 3
      %p151 = por %p149, %p150
      %p152 = scmp.ne.s32.totalorder %s141, %s142
      %p153 = scmp.eq.s32.totalorder %s43, 0
      %p154 = por %p152, %p153
      %p155 = scmp.ne.s32.totalorder %s141, %s142
      %p156 = scmp.eq.s32.totalorder %s44, 3
      %p157 = por %p155, %p156
      %p159 = scmp.ne.s32.totalorder %s142, %s158
      %p160 = scmp.eq.s32.totalorder %s44, 0
      %p161 = por %p159, %p160
      %s162 = ssub.s32 %s46, %s53
      %p163 = scmp.eq.s32.totalorder %s162, 0
      %s165 = sadd.s32 %s164, 1
      %s166 = scalar_select %p163, %s164, %s165
      %p169 = pneg %p163
      %p170 = scmp.eq.s32.totalorder %s38, 3
      %p171 = por %p169, %p170
      %p172 = scmp.ne.s32.totalorder %s164, %s167
      %p173 = scmp.eq.s32.totalorder %s38, 0
      %p174 = por %p172, %p173
      %p175 = scmp.ne.s32.totalorder %s164, %s167
      %p176 = scmp.eq.s32.totalorder %s43, 3
      %p177 = por %p175, %p176
      %p178 = scmp.ne.s32.totalorder %s167, %s168
      %p179 = scmp.eq.s32.totalorder %s43, 0
      %p180 = por %p178, %p179
      %p181 = scmp.ne.s32.totalorder %s167, %s168
      %p182 = scmp.eq.s32.totalorder %s44, 3
      %p183 = por %p181, %p182
      %p185 = scmp.ne.s32.totalorder %s168, %s184
      %p186 = scmp.eq.s32.totalorder %s44, 0
      %p187 = por %p185, %p186
      %s188 = ssub.s32 %s46, %s53
      %p189 = scmp.eq.s32.totalorder %s188, 0
      %s191 = sadd.s32 %s190, 1
      %s192 = scalar_select %p189, %s190, %s191
      %p195 = pneg %p189
      %p196 = scmp.eq.s32.totalorder %s38, 3
      %p197 = por %p195, %p196
      %p198 = scmp.ne.s32.totalorder %s190, %s193
      %p199 = scmp.eq.s32.totalorder %s38, 0
      %p200 = por %p198, %p199
      %p201 = scmp.ne.s32.totalorder %s190, %s193
      %p202 = scmp.eq.s32.totalorder %s43, 3
      %p203 = por %p201, %p202
      %p204 = scmp.ne.s32.totalorder %s193, %s194
      %p205 = scmp.eq.s32.totalorder %s43, 0
      %p206 = por %p204, %p205
      %p207 = scmp.ne.s32.totalorder %s193, %s194
      %p208 = scmp.eq.s32.totalorder %s44, 3
      %p209 = por %p207, %p208
      %p211 = scmp.ne.s32.totalorder %s194, %s210
      %p212 = scmp.eq.s32.totalorder %s44, 0
      %p213 = por %p211, %p212
      %s214 = ssub.s32 %s46, %s53
      %p215 = scmp.eq.s32.totalorder %s214, 0
      %s217 = sadd.s32 %s216, 1
      %s218 = scalar_select %p215, %s216, %s217
      %p221 = pneg %p215
      %p222 = scmp.eq.s32.totalorder %s38, 3
      %p223 = por %p221, %p222
      %p224 = scmp.ne.s32.totalorder %s216, %s219
      %p225 = scmp.eq.s32.totalorder %s38, 0
      %p226 = por %p224, %p225
      %p227 = scmp.ne.s32.totalorder %s216, %s219
      %p228 = scmp.eq.s32.totalorder %s43, 3
      %p229 = por %p227, %p228
      %p230 = scmp.ne.s32.totalorder %s219, %s220
      %p231 = scmp.eq.s32.totalorder %s43, 0
      %p232 = por %p230, %p231
      %p233 = scmp.ne.s32.totalorder %s219, %s220
      %p234 = scmp.eq.s32.totalorder %s44, 3
      %p235 = por %p233, %p234
      %p237 = scmp.ne.s32.totalorder %s220, %s236
      %p238 = scmp.eq.s32.totalorder %s44, 0
      %p239 = por %p237, %p238
      %s240 = ssub.s32 %s46, %s53
      %p241 = scmp.eq.s32.totalorder %s240, 0
      %s243 = sadd.s32 %s242, 1
      %s244 = scalar_select %p241, %s242, %s243
      %p247 = pneg %p241
      %p248 = scmp.eq.s32.totalorder %s38, 3
      %p249 = por %p247, %p248
      %p250 = scmp.ne.s32.totalorder %s242, %s245
      %p251 = scmp.eq.s32.totalorder %s38, 0
      %p252 = por %p250, %p251
      %p253 = scmp.ne.s32.totalorder %s242, %s245
      %p254 = scmp.eq.s32.totalorder %s43, 3
      %p255 = por %p253, %p254
      %p256 = scmp.ne.s32.totalorder %s245, %s246
      %p257 = scmp.eq.s32.totalorder %s43, 0
      %p258 = por %p256, %p257
      %p259 = scmp.ne.s32.totalorder %s245, %s246
      %p260 = scmp.eq.s32.totalorder %s44, 3
      %p261 = por %p259, %p260
      %p263 = scmp.ne.s32.totalorder %s246, %s262
      %p264 = scmp.eq.s32.totalorder %s44, 0
      %p265 = por %p263, %p264
      %s266 = ssub.s32 %s46, %s53
      %p267 = scmp.eq.s32.totalorder %s266, 0
      %s269 = sadd.s32 %s268, 1
      %s270 = scalar_select %p267, %s268, %s269
      %p273 = pneg %p267
      %p274 = scmp.eq.s32.totalorder %s38, 3
      %p275 = por %p273, %p274
      %p276 = scmp.ne.s32.totalorder %s268, %s271
      %p277 = scmp.eq.s32.totalorder %s38, 0
      %p278 = por %p276, %p277
      %p279 = scmp.ne.s32.totalorder %s268, %s271
      %p280 = scmp.eq.s32.totalorder %s43, 3
      %p281 = por %p279, %p280
      %p282 = scmp.ne.s32.totalorder %s271, %s272
      %p283 = scmp.eq.s32.totalorder %s43, 0
      %p284 = por %p282, %p283
      %p285 = scmp.ne.s32.totalorder %s271, %s272
      %p286 = scmp.eq.s32.totalorder %s44, 3
      %p287 = por %p285, %p286
      %p289 = scmp.ne.s32.totalorder %s272, %s288
      %p290 = scmp.eq.s32.totalorder %s44, 0
      %p291 = por %p289, %p290
      %s292 = ssub.s32 %s46, %s53
      %p293 = scmp.eq.s32.totalorder %s292, 0
      %s295 = sadd.s32 %s294, 1
      %s296 = scalar_select %p293, %s294, %s295
      %p299 = pneg %p293
      %p300 = scmp.eq.s32.totalorder %s38, 3
      %p301 = por %p299, %p300
      %p302 = scmp.ne.s32.totalorder %s294, %s297
      %p303 = scmp.eq.s32.totalorder %s38, 0
      %p304 = por %p302, %p303
      %p305 = scmp.ne.s32.totalorder %s294, %s297
      %p306 = scmp.eq.s32.totalorder %s43, 3
      %p307 = por %p305, %p306
      %p308 = scmp.ne.s32.totalorder %s297, %s298
      %p309 = scmp.eq.s32.totalorder %s43, 0
      %p310 = por %p308, %p309
      %p311 = scmp.ne.s32.totalorder %s297, %s298
      %p312 = scmp.eq.s32.totalorder %s44, 3
      %p313 = por %p311, %p312
      %p315 = scmp.ne.s32.totalorder %s298, %s314
      %p316 = scmp.eq.s32.totalorder %s44, 0
      %p317 = por %p315, %p316
      %s318 = ssub.s32 %s46, %s53
      %p319 = scmp.eq.s32.totalorder %s318, 0
      %s321 = sadd.s32 %s320, 1
      %s322 = scalar_select %p319, %s320, %s321
      %p325 = pneg %p319
      %p326 = scmp.eq.s32.totalorder %s38, 3
      %p327 = por %p325, %p326
      %p328 = scmp.ne.s32.totalorder %s320, %s323
      %p329 = scmp.eq.s32.totalorder %s38, 0
      %p330 = por %p328, %p329
      %p331 = scmp.ne.s32.totalorder %s320, %s323
      %p332 = scmp.eq.s32.totalorder %s43, 3
      %p333 = por %p331, %p332
      %p334 = scmp.ne.s32.totalorder %s323, %s324
      %p335 = scmp.eq.s32.totalorder %s43, 0
      %p336 = por %p334, %p335
      %p337 = scmp.ne.s32.totalorder %s323, %s324
      %p338 = scmp.eq.s32.totalorder %s44, 3
      %p339 = por %p337, %p338
      %p341 = scmp.ne.s32.totalorder %s324, %s340
      %p342 = scmp.eq.s32.totalorder %s44, 0
      %p343 = por %p341, %p342
      %s344 = ssub.s32 %s46, %s53
      %p345 = scmp.eq.s32.totalorder %s344, 0
      %s347 = sadd.s32 %s346, 1
      %s348 = scalar_select %p345, %s346, %s347
      %p351 = pneg %p345
      %p352 = scmp.eq.s32.totalorder %s38, 3
      %p353 = por %p351, %p352
      %p354 = scmp.ne.s32.totalorder %s346, %s349
      %p355 = scmp.eq.s32.totalorder %s38, 0
      %p356 = por %p354, %p355
      %p357 = scmp.ne.s32.totalorder %s346, %s349
      %p358 = scmp.eq.s32.totalorder %s43, 3
      %p359 = por %p357, %p358
      %p360 = scmp.ne.s32.totalorder %s349, %s350
      %p361 = scmp.eq.s32.totalorder %s43, 0
      %p362 = por %p360, %p361
      %p363 = scmp.ne.s32.totalorder %s349, %s350
      %p364 = scmp.eq.s32.totalorder %s44, 3
      %p365 = por %p363, %p364
      %p367 = scmp.ne.s32.totalorder %s350, %s366
      %p368 = scmp.eq.s32.totalorder %s44, 0
      %p369 = por %p367, %p368
      %s370 = ssub.s32 %s46, %s53
      %p371 = scmp.eq.s32.totalorder %s370, 0
      %s373 = sadd.s32 %s372, 1
      %s374 = scalar_select %p371, %s372, %s373
      %p377 = pneg %p371
      %p378 = scmp.eq.s32.totalorder %s38, 3
      %p379 = por %p377, %p378
      %p380 = scmp.ne.s32.totalorder %s372, %s375
      %p381 = scmp.eq.s32.totalorder %s38, 0
      %p382 = por %p380, %p381
      %p383 = scmp.ne.s32.totalorder %s372, %s375
      %p384 = scmp.eq.s32.totalorder %s43, 3
      %p385 = por %p383, %p384
      %p386 = scmp.ne.s32.totalorder %s375, %s376
      %p387 = scmp.eq.s32.totalorder %s43, 0
      %p388 = por %p386, %p387
      %p389 = scmp.ne.s32.totalorder %s375, %s376
      %p390 = scmp.eq.s32.totalorder %s44, 3
      %p391 = por %p389, %p390
      %p393 = scmp.ne.s32.totalorder %s376, %s392
      %p394 = scmp.eq.s32.totalorder %s44, 0
      %p395 = por %p393, %p394
      %s396 = ssub.s32 %s46, %s53
      %p397 = scmp.eq.s32.totalorder %s396, 0
      %s399 = sadd.s32 %s398, 1
      %s400 = scalar_select %p397, %s398, %s399
      %p403 = pneg %p397
      %p404 = scmp.eq.s32.totalorder %s38, 3
      %p405 = por %p403, %p404
      %p406 = scmp.ne.s32.totalorder %s398, %s401
      %p407 = scmp.eq.s32.totalorder %s38, 0
      %p408 = por %p406, %p407
      %p409 = scmp.ne.s32.totalorder %s398, %s401
      %p410 = scmp.eq.s32.totalorder %s43, 3
      %p411 = por %p409, %p410
      %p412 = scmp.ne.s32.totalorder %s401, %s402
      %p413 = scmp.eq.s32.totalorder %s43, 0
      %p414 = por %p412, %p413
      %p415 = scmp.ne.s32.totalorder %s401, %s402
      %p416 = scmp.eq.s32.totalorder %s44, 3
      %p417 = por %p415, %p416
      %p419 = scmp.ne.s32.totalorder %s402, %s418
      %p420 = scmp.eq.s32.totalorder %s44, 0
      %p421 = por %p419, %p420
      %s422 = ssub.s32 %s46, %s53
      %p423 = scmp.eq.s32.totalorder %s422, 0
      %s425 = sadd.s32 %s424, 1
      %s426 = scalar_select %p423, %s424, %s425
      %p429 = pneg %p423
      %p430 = scmp.eq.s32.totalorder %s38, 3
      %p431 = por %p429, %p430
      %p432 = scmp.ne.s32.totalorder %s424, %s427
      %p433 = scmp.eq.s32.totalorder %s38, 0
      %p434 = por %p432, %p433
      %p435 = scmp.ne.s32.totalorder %s424, %s427
      %p436 = scmp.eq.s32.totalorder %s43, 3
      %p437 = por %p435, %p436
      %p438 = scmp.ne.s32.totalorder %s427, %s428
      %p439 = scmp.eq.s32.totalorder %s43, 0
      %p440 = por %p438, %p439
      %p441 = scmp.ne.s32.totalorder %s427, %s428
      %p442 = scmp.eq.s32.totalorder %s44, 3
      %p443 = por %p441, %p442
      %p445 = scmp.ne.s32.totalorder %s428, %s444
      %p446 = scmp.eq.s32.totalorder %s44, 0
      %p447 = por %p445, %p446
      %s448 = ssub.s32 %s46, %s53
      %p449 = scmp.eq.s32.totalorder %s448, 0
      %s451 = sadd.s32 %s450, 1
      %s452 = scalar_select %p449, %s450, %s451
      %p455 = pneg %p449
      %p456 = scmp.eq.s32.totalorder %s38, 3
      %p457 = por %p455, %p456
      %p458 = scmp.ne.s32.totalorder %s450, %s453
      %p459 = scmp.eq.s32.totalorder %s38, 0
      %p460 = por %p458, %p459
      %p461 = scmp.ne.s32.totalorder %s450, %s453
      %p462 = scmp.eq.s32.totalorder %s43, 3
      %p463 = por %p461, %p462
      %p464 = scmp.ne.s32.totalorder %s453, %s454
      %p465 = scmp.eq.s32.totalorder %s43, 0
      %p466 = por %p464, %p465
      %p467 = scmp.ne.s32.totalorder %s453, %s454
      %p468 = scmp.eq.s32.totalorder %s44, 3
      %p469 = por %p467, %p468
      %p471 = scmp.ne.s32.totalorder %s454, %s470
      %p472 = scmp.eq.s32.totalorder %s44, 0
      %p473 = por %p471, %p472
      %s474 = ssub.s32 %s46, %s53
      %p475 = scmp.eq.s32.totalorder %s474, 0
      %s477 = sadd.s32 %s476, 1
      %s478 = scalar_select %p475, %s476, %s477
      %p481 = pneg %p475
      %p482 = scmp.eq.s32.totalorder %s38, 3
      %p483 = por %p481, %p482
      %p484 = scmp.ne.s32.totalorder %s476, %s479
      %p485 = scmp.eq.s32.totalorder %s38, 0
      %p486 = por %p484, %p485
      %p487 = scmp.ne.s32.totalorder %s476, %s479
      %p488 = scmp.eq.s32.totalorder %s43, 3
      %p489 = por %p487, %p488
      %p490 = scmp.ne.s32.totalorder %s479, %s480
      %p491 = scmp.eq.s32.totalorder %s43, 0
      %p492 = por %p490, %p491
      %p493 = scmp.ne.s32.totalorder %s479, %s480
      %p494 = scmp.eq.s32.totalorder %s44, 3
      %p495 = por %p493, %p494
      %p497 = scmp.ne.s32.totalorder %s480, %s496
      %p498 = scmp.eq.s32.totalorder %s44, 0
      %p499 = por %p497, %p498
      %s500 = ssub.s32 %s46, %s53
      %p501 = scmp.eq.s32.totalorder %s500, 0
      %s503 = sadd.s32 %s502, 1
      %s504 = scalar_select %p501, %s502, %s503
      %p507 = pneg %p501
      %p508 = scmp.eq.s32.totalorder %s38, 3
      %p509 = por %p507, %p508
      %p510 = scmp.ne.s32.totalorder %s502, %s505
      %p511 = scmp.eq.s32.totalorder %s38, 0
      %p512 = por %p510, %p511
      %p513 = scmp.ne.s32.totalorder %s502, %s505
      %p514 = scmp.eq.s32.totalorder %s43, 3
      %p515 = por %p513, %p514
      %p516 = scmp.ne.s32.totalorder %s505, %s506
      %p517 = scmp.eq.s32.totalorder %s43, 0
      %p518 = por %p516, %p517
      %p519 = scmp.ne.s32.totalorder %s505, %s506
      %p520 = scmp.eq.s32.totalorder %s44, 3
      %p521 = por %p519, %p520
      %p523 = scmp.ne.s32.totalorder %s506, %s522
      %p524 = scmp.eq.s32.totalorder %s44, 0
      %p525 = por %p523, %p524
      %s527 = sadd.s32 %s526, 1
      %p530 = scmp.eq.s32.totalorder %s38, 3
      %p531 = scmp.ne.s32.totalorder %s526, %s528
      %p532 = scmp.eq.s32.totalorder %s38, 0
      %p533 = por %p531, %p532
      %p534 = scmp.ne.s32.totalorder %s526, %s528
      %p535 = scmp.eq.s32.totalorder %s43, 3
      %p536 = por %p534, %p535
      %p537 = scmp.ne.s32.totalorder %s528, %s529
      %p538 = scmp.eq.s32.totalorder %s43, 0
      %p539 = por %p537, %p538
      %p540 = scmp.ne.s32.totalorder %s528, %s529
      %p541 = scmp.eq.s32.totalorder %s44, 3
      %p542 = por %p540, %p541
      %p544 = scmp.ne.s32.totalorder %s529, %s543
      %p545 = scmp.eq.s32.totalorder %s44, 0
      %p546 = por %p544, %p545
      %s548 = sadd.s32 %s547, 1
      %p551 = scmp.eq.s32.totalorder %s38, 3
      %p552 = scmp.ne.s32.totalorder %s547, %s549
      %p553 = scmp.eq.s32.totalorder %s38, 0
      %p554 = por %p552, %p553
      %p555 = scmp.ne.s32.totalorder %s547, %s549
      %p556 = scmp.eq.s32.totalorder %s43, 3
      %p557 = por %p555, %p556
      %p558 = scmp.ne.s32.totalorder %s549, %s550
      %p559 = scmp.eq.s32.totalorder %s43, 0
      %p560 = por %p558, %p559
      %p561 = scmp.ne.s32.totalorder %s549, %s550
      %p562 = scmp.eq.s32.totalorder %s44, 3
      %p563 = por %p561, %p562
      %p565 = scmp.ne.s32.totalorder %s550, %s564
      %p566 = scmp.eq.s32.totalorder %s44, 0
      %p567 = por %p565, %p566
      %s568 = ssub.s32 %s45, %s57
      %p569 = scmp.eq.s32.totalorder %s568, 0
      %s571 = sadd.s32 %s570, 1
      %s572 = scalar_select %p569, %s570, %s571
      %p575 = pneg %p569
      %p576 = scmp.eq.s32.totalorder %s38, 3
      %p577 = por %p575, %p576
      %p578 = scmp.ne.s32.totalorder %s570, %s573
      %p579 = scmp.eq.s32.totalorder %s38, 0
      %p580 = por %p578, %p579
      %p581 = scmp.ne.s32.totalorder %s570, %s573
      %p582 = scmp.eq.s32.totalorder %s43, 3
      %p583 = por %p581, %p582
      %p584 = scmp.ne.s32.totalorder %s573, %s574
      %p585 = scmp.eq.s32.totalorder %s43, 0
      %p586 = por %p584, %p585
      %p587 = scmp.ne.s32.totalorder %s573, %s574
      %p588 = scmp.eq.s32.totalorder %s44, 3
      %p589 = por %p587, %p588
      %p591 = scmp.ne.s32.totalorder %s574, %s590
      %p592 = scmp.eq.s32.totalorder %s44, 0
      %p593 = por %p591, %p592
      %p594 = scmp.le.s32.totalorder 1, %s38
      %p595 = scmp.lt.s32.totalorder %s38, 5
      %p596 = pnand %p594, %p595
      %p597 = pneg %p596
      // Predicated region
      $region9: #{tpu_custom_call.1} parent=5 // pred_check
        _
      $region10: #{tpu_custom_call.1} parent=5 // pred_check_branch
        %599 = sbr.rel (%p596) target = $region12
      $region11: #{tpu_custom_call.1} parent=5 // pred_region
        %s600 = ssub.s32 %s38, 1
        // Predicated region
        $region13: #{tpu_custom_call.1} parent=11 // pred_check
          %p601 = pneg %p539
        $region14: #{tpu_custom_call.1} parent=11 // pred_check_branch
          %603 = sbr.rel (%p601) target = $region16
        $region15: #{tpu_custom_call.1} parent=11 // pred_region
          _
        $region16: #{tpu_custom_call.1} parent=11 // pred_fallthru
          _
        // Predicated region
        $region17: #{tpu_custom_call.1} parent=11 // pred_check
          %p604 = pneg %p560
        $region18: #{tpu_custom_call.1} parent=11 // pred_check_branch
          %606 = sbr.rel (%p604) target = $region20
        $region19: #{tpu_custom_call.1} parent=11 // pred_region
          _
        $region20: #{tpu_custom_call.1} parent=11 // pred_fallthru
          _
      $region12: #{tpu_custom_call.1} parent=5 // pred_fallthru
        _
      %p607 = scmp.lt.s32.totalorder %s38, 4
      // Predicated region
      $region21: #{tpu_custom_call.1} parent=5 // pred_check
        %p608 = pneg %p607
      $region22: #{tpu_custom_call.1} parent=5 // pred_check_branch
        %610 = sbr.rel (%p608) target = $region24
      $region23: #{tpu_custom_call.1} parent=5 // pred_region
        // Predicated region
        $region25: #{tpu_custom_call.1} parent=23 // pred_check
          %p611 = pneg %p70
        $region26: #{tpu_custom_call.1} parent=23 // pred_check_branch
          %613 = sbr.rel (%p611) target = $region28
        $region27: #{tpu_custom_call.1} parent=23 // pred_region
          %p614 = scmp.lt.s32.totalorder %s45, 1
          %s615 = scalar_select %p614, %s45, 1
          %s616 = smul.addr %s615, 2
          %s617 = smul.addr %s616, 8
          %s618 = scalar_lea.vmem %s0, %s617
        $region28: #{tpu_custom_call.1} parent=23 // pred_fallthru
          _
        // Predicated region
        $region29: #{tpu_custom_call.1} parent=23 // pred_check
          %p619 = pneg %p96
        $region30: #{tpu_custom_call.1} parent=23 // pred_check_branch
          %621 = sbr.rel (%p619) target = $region32
        $region31: #{tpu_custom_call.1} parent=23 // pred_region
          %p622 = scmp.lt.s32.totalorder %s45, 1
          %s623 = scalar_select %p622, %s45, 1
          %s624 = smul.addr %s623, 2
          %s625 = smul.addr %s624, 8
          %s626 = scalar_lea.vmem %s1, %s625
        $region32: #{tpu_custom_call.1} parent=23 // pred_fallthru
          _
        // Predicated region
        $region33: #{tpu_custom_call.1} parent=23 // pred_check
          %p627 = pneg %p122
        $region34: #{tpu_custom_call.1} parent=23 // pred_check_branch
          %629 = sbr.rel (%p627) target = $region36
        $region35: #{tpu_custom_call.1} parent=23 // pred_region
          %p630 = scmp.lt.s32.totalorder %s46, 1
          %s631 = scalar_select %p630, %s46, 1
          %s632 = smul.addr %s631, 4
          %s633 = smul.addr %s632, 4
          %s634 = scalar_lea.vmem %s2, %s633
        $region36: #{tpu_custom_call.1} parent=23 // pred_fallthru
          _
        // Predicated region
        $region37: #{tpu_custom_call.1} parent=23 // pred_check
          %p635 = pneg %p148
        $region38: #{tpu_custom_call.1} parent=23 // pred_check_branch
          %637 = sbr.rel (%p635) target = $region40
        $region39: #{tpu_custom_call.1} parent=23 // pred_region
          %s638 = sand.u32 %s138, 1
          %s639 = scalar_lea.sflag [#allocation4], %s638
          %s640 = sand.u32 %s138, 1
          %s641 = smul.addr %s640, 16
          %s642 = scalar_lea.vmem [#allocation3], %s641
          %s644 = ssub.s32 256, 256
          %645 = vsyncadd %s639, %s644
          %s646 = smul.addr %s46, 4
          %s647 = smul.addr %s646, 64
          %s648 = scalar_lea.hbm %s3, %s647
          %s649 = sshll.u32 %s642, 4
          %s650 = int_to_ptr.vmem [resolvable:$true] %s649
          %655 = dma.hbm_to_vmem [thread:$0]  %s648, 256, %s650, %s639, 64, 64, 4
        $region40: #{tpu_custom_call.1} parent=23 // pred_fallthru
          _
        // Predicated region
        $region41: #{tpu_custom_call.1} parent=23 // pred_check
          %p656 = pneg %p174
        $region42: #{tpu_custom_call.1} parent=23 // pred_check_branch
          %658 = sbr.rel (%p656) target = $region44
        $region43: #{tpu_custom_call.1} parent=23 // pred_region
          %s659 = sand.u32 %s38, 1
          %s660 = scalar_lea.sflag [#allocation7], %s659
          %s661 = sand.u32 %s164, 1
          %s662 = smul.addr %s661, 16
          %s663 = scalar_lea.vmem [#allocation6], %s662
          %s665 = ssub.s32 256, 256
          %666 = vsyncadd %s660, %s665
          %s667 = smul.addr %s46, 4
          %s668 = smul.addr %s667, 64
          %s669 = scalar_lea.hbm %s4, %s668
          %s670 = sshll.u32 %s663, 4
          %s671 = int_to_ptr.vmem [resolvable:$true] %s670
          %676 = dma.hbm_to_vmem [thread:$0]  %s669, 256, %s671, %s660, 64, 64, 4
        $region44: #{tpu_custom_call.1} parent=23 // pred_fallthru
          _
        // Predicated region
        $region45: #{tpu_custom_call.1} parent=23 // pred_check
          %p677 = pneg %p200
        $region46: #{tpu_custom_call.1} parent=23 // pred_check_branch
          %679 = sbr.rel (%p677) target = $region48
        $region47: #{tpu_custom_call.1} parent=23 // pred_region
          %p680 = scmp.lt.s32.totalorder %s46, 1
          %s681 = scalar_select %p680, %s46, 1
          %s682 = scalar_lea.vmem %s5, %s681
        $region48: #{tpu_custom_call.1} parent=23 // pred_fallthru
          _
        // Predicated region
        $region49: #{tpu_custom_call.1} parent=23 // pred_check
          %p683 = pneg %p226
        $region50: #{tpu_custom_call.1} parent=23 // pred_check_branch
          %685 = sbr.rel (%p683) target = $region52
        $region51: #{tpu_custom_call.1} parent=23 // pred_region
          %p686 = scmp.lt.s32.totalorder %s46, 1
          %s687 = scalar_select %p686, %s46, 1
          %s688 = scalar_lea.vmem %s6, %s687
        $region52: #{tpu_custom_call.1} parent=23 // pred_fallthru
          _
        // Predicated region
        $region53: #{tpu_custom_call.1} parent=23 // pred_check
          %p689 = pneg %p252
        $region54: #{tpu_custom_call.1} parent=23 // pred_check_branch
          %691 = sbr.rel (%p689) target = $region56
        $region55: #{tpu_custom_call.1} parent=23 // pred_region
          %p692 = scmp.lt.s32.totalorder %s46, 1
          %s693 = scalar_select %p692, %s46, 1
          %s694 = scalar_lea.vmem %s7, %s693
        $region56: #{tpu_custom_call.1} parent=23 // pred_fallthru
          _
        // Predicated region
        $region57: #{tpu_custom_call.1} parent=23 // pred_check
          %p695 = pneg %p278
        $region58: #{tpu_custom_call.1} parent=23 // pred_check_branch
          %697 = sbr.rel (%p695) target = $region60
        $region59: #{tpu_custom_call.1} parent=23 // pred_region
          %s698 = sand.u32 %s38, 1
          %s699 = scalar_lea.sflag [#allocation7], %s698
          %s700 = sand.u32 %s268, 1
          %s701 = smul.addr %s700, 16
          %s702 = scalar_lea.vmem [#allocation8], %s701
          %s704 = ssub.s32 256, 256
          %705 = vsyncadd %s699, %s704
          %s706 = smul.addr %s46, 4
          %s707 = smul.addr %s706, 64
          %s708 = scalar_lea.hbm %s8, %s707
          %s709 = sshll.u32 %s702, 4
          %s710 = int_to_ptr.vmem [resolvable:$true] %s709
          %715 = dma.hbm_to_vmem [thread:$0]  %s708, 256, %s710, %s699, 64, 64, 4
        $region60: #{tpu_custom_call.1} parent=23 // pred_fallthru
          _
        // Predicated region
        $region61: #{tpu_custom_call.1} parent=23 // pred_check
          %p716 = pneg %p304
        $region62: #{tpu_custom_call.1} parent=23 // pred_check_branch
          %718 = sbr.rel (%p716) target = $region64
        $region63: #{tpu_custom_call.1} parent=23 // pred_region
          %p719 = scmp.lt.s32.totalorder %s46, 1
          %s720 = scalar_select %p719, %s46, 1
          %s721 = scalar_lea.vmem %s9, %s720
        $region64: #{tpu_custom_call.1} parent=23 // pred_fallthru
          _
        // Predicated region
        $region65: #{tpu_custom_call.1} parent=23 // pred_check
          %p722 = pneg %p330
        $region66: #{tpu_custom_call.1} parent=23 // pred_check_branch
          %724 = sbr.rel (%p722) target = $region68
        $region67: #{tpu_custom_call.1} parent=23 // pred_region
          %s725 = sand.u32 %s320, 1
          %s726 = scalar_lea.sflag [#allocation10], %s725
          %s727 = sand.u32 %s320, 1
          %s728 = smul.addr %s727, 16
          %s729 = scalar_lea.vmem [#allocation9], %s728
          %s731 = ssub.s32 256, 256
          %732 = vsyncadd %s726, %s731
          %s733 = smul.addr %s46, 4
          %s734 = smul.addr %s733, 64
          %s735 = scalar_lea.hbm %s10, %s734
          %s736 = sshll.u32 %s729, 4
          %s737 = int_to_ptr.vmem [resolvable:$true] %s736
          %742 = dma.hbm_to_vmem [thread:$0]  %s735, 256, %s737, %s726, 64, 64, 4
        $region68: #{tpu_custom_call.1} parent=23 // pred_fallthru
          _
        // Predicated region
        $region69: #{tpu_custom_call.1} parent=23 // pred_check
          %p743 = pneg %p356
        $region70: #{tpu_custom_call.1} parent=23 // pred_check_branch
          %745 = sbr.rel (%p743) target = $region72
        $region71: #{tpu_custom_call.1} parent=23 // pred_region
          %p746 = scmp.lt.s32.totalorder %s46, 1
          %s747 = scalar_select %p746, %s46, 1
          %s748 = scalar_lea.vmem %s11, %s747
        $region72: #{tpu_custom_call.1} parent=23 // pred_fallthru
          _
        // Predicated region
        $region73: #{tpu_custom_call.1} parent=23 // pred_check
          %p749 = pneg %p382
        $region74: #{tpu_custom_call.1} parent=23 // pred_check_branch
          %751 = sbr.rel (%p749) target = $region76
        $region75: #{tpu_custom_call.1} parent=23 // pred_region
          %p752 = scmp.lt.s32.totalorder %s46, 1
          %s753 = scalar_select %p752, %s46, 1
          %s754 = smul.addr %s753, 8
          %s755 = smul.addr %s754, 4
          %s756 = scalar_lea.vmem %s12, %s755
        $region76: #{tpu_custom_call.1} parent=23 // pred_fallthru
          _
        // Predicated region
        $region77: #{tpu_custom_call.1} parent=23 // pred_check
          %p757 = pneg %p408
        $region78: #{tpu_custom_call.1} parent=23 // pred_check_branch
          %759 = sbr.rel (%p757) target = $region80
        $region79: #{tpu_custom_call.1} parent=23 // pred_region
          %p760 = scmp.lt.s32.totalorder %s46, 1
          %s761 = scalar_select %p760, %s46, 1
          %s762 = scalar_lea.vmem %s13, %s761
        $region80: #{tpu_custom_call.1} parent=23 // pred_fallthru
          _
        // Predicated region
        $region81: #{tpu_custom_call.1} parent=23 // pred_check
          %p763 = pneg %p434
        $region82: #{tpu_custom_call.1} parent=23 // pred_check_branch
          %765 = sbr.rel (%p763) target = $region84
        $region83: #{tpu_custom_call.1} parent=23 // pred_region
          %p766 = scmp.lt.s32.totalorder %s46, 1
          %s767 = scalar_select %p766, %s46, 1
          %s768 = scalar_lea.vmem %s14, %s767
        $region84: #{tpu_custom_call.1} parent=23 // pred_fallthru
          _
        // Predicated region
        $region85: #{tpu_custom_call.1} parent=23 // pred_check
          %p769 = pneg %p460
        $region86: #{tpu_custom_call.1} parent=23 // pred_check_branch
          %771 = sbr.rel (%p769) target = $region88
        $region87: #{tpu_custom_call.1} parent=23 // pred_region
          %p772 = scmp.lt.s32.totalorder %s46, 1
          %s773 = scalar_select %p772, %s46, 1
          %s774 = scalar_lea.vmem %s15, %s773
        $region88: #{tpu_custom_call.1} parent=23 // pred_fallthru
          _
        // Predicated region
        $region89: #{tpu_custom_call.1} parent=23 // pred_check
          %p775 = pneg %p486
        $region90: #{tpu_custom_call.1} parent=23 // pred_check_branch
          %777 = sbr.rel (%p775) target = $region92
        $region91: #{tpu_custom_call.1} parent=23 // pred_region
          %p778 = scmp.lt.s32.totalorder %s46, 1
          %s779 = scalar_select %p778, %s46, 1
          %s780 = scalar_lea.vmem %s16, %s779
        $region92: #{tpu_custom_call.1} parent=23 // pred_fallthru
          _
        // Predicated region
        $region93: #{tpu_custom_call.1} parent=23 // pred_check
          %p781 = pneg %p512
        $region94: #{tpu_custom_call.1} parent=23 // pred_check_branch
          %783 = sbr.rel (%p781) target = $region96
        $region95: #{tpu_custom_call.1} parent=23 // pred_region
          %p784 = scmp.lt.s32.totalorder %s46, 1
          %s785 = scalar_select %p784, %s46, 1
          %s786 = scalar_lea.vmem %s17, %s785
        $region96: #{tpu_custom_call.1} parent=23 // pred_fallthru
          _
      $region24: #{tpu_custom_call.1} parent=5 // pred_fallthru
        _
      %p787 = scmp.le.s32.totalorder 1, %s38
      %p788 = scmp.lt.s32.totalorder %s38, 5
      %p789 = pnand %p787, %p788
      %p790 = pneg %p789
      // Predicated region
      $region97: #{tpu_custom_call.1} parent=5 // pred_check
        _
      $region98: #{tpu_custom_call.1} parent=5 // pred_check_branch
        %792 = sbr.rel (%p789) target = $region100
      $region99: #{tpu_custom_call.1} parent=5 // pred_region
        %s793 = ssub.s32 %s38, 1
        %s794 = sand.u32 %s141, 1
        %s795 = scalar_lea.sflag [#allocation4], %s794
        %s796 = sand.u32 %s141, 1
        %s797 = smul.addr %s796, 16
        %s798 = scalar_lea.vmem [#allocation3], %s797
        // Predicated region
        $region101: #{tpu_custom_call.1} parent=99 // pred_check
          %p799 = pneg %p154
        $region102: #{tpu_custom_call.1} parent=99 // pred_check_branch
          %801 = sbr.rel (%p799) target = $region104
        $region103: #{tpu_custom_call.1} parent=99 // pred_region
          %802 = dma.done %s795, 256
        $region104: #{tpu_custom_call.1} parent=99 // pred_fallthru
          _
        %s803 = sand.u32 %s43, 1
        %s804 = scalar_lea.sflag [#allocation7], %s803
        %s805 = sand.u32 %s167, 1
        %s806 = smul.addr %s805, 16
        %s807 = scalar_lea.vmem [#allocation6], %s806
        // Predicated region
        $region105: #{tpu_custom_call.1} parent=99 // pred_check
          %p808 = pneg %p180
        $region106: #{tpu_custom_call.1} parent=99 // pred_check_branch
          %810 = sbr.rel (%p808) target = $region108
        $region107: #{tpu_custom_call.1} parent=99 // pred_region
          %811 = dma.done %s804, 256
        $region108: #{tpu_custom_call.1} parent=99 // pred_fallthru
          _
        %s812 = sand.u32 %s43, 1
        %s813 = scalar_lea.sflag [#allocation7], %s812
        %s814 = sand.u32 %s271, 1
        %s815 = smul.addr %s814, 16
        %s816 = scalar_lea.vmem [#allocation8], %s815
        // Predicated region
        $region109: #{tpu_custom_call.1} parent=99 // pred_check
          %p817 = pneg %p284
        $region110: #{tpu_custom_call.1} parent=99 // pred_check_branch
          %819 = sbr.rel (%p817) target = $region112
        $region111: #{tpu_custom_call.1} parent=99 // pred_region
          %820 = dma.done %s813, 256
        $region112: #{tpu_custom_call.1} parent=99 // pred_fallthru
          _
        %s821 = sand.u32 %s323, 1
        %s822 = scalar_lea.sflag [#allocation10], %s821
        %s823 = sand.u32 %s323, 1
        %s824 = smul.addr %s823, 16
        %s825 = scalar_lea.vmem [#allocation9], %s824
        // Predicated region
        $region113: #{tpu_custom_call.1} parent=99 // pred_check
          %p826 = pneg %p336
        $region114: #{tpu_custom_call.1} parent=99 // pred_check_branch
          %828 = sbr.rel (%p826) target = $region116
        $region115: #{tpu_custom_call.1} parent=99 // pred_region
          %829 = dma.done %s822, 256
        $region116: #{tpu_custom_call.1} parent=99 // pred_fallthru
          _
        %p830 = scmp.lt.s32.totalorder %s47, 1
        %s831 = scalar_select %p830, %s47, 1
        %s832 = smul.addr %s831, 2
        %s833 = smul.addr %s832, 8
        %s834 = scalar_lea.vmem %s0, %s833
        %p835 = pneg %p76
        %p836 = pneg %p73
        %p837 = scmp.lt.s32.totalorder %s47, 1
        %s838 = scalar_select %p837, %s47, 1
        %s839 = smul.addr %s838, 2
        %s840 = smul.addr %s839, 8
        %s841 = scalar_lea.vmem %s1, %s840
        %p842 = pneg %p102
        %p843 = pneg %p99
        %p844 = scmp.lt.s32.totalorder %s48, 1
        %s845 = scalar_select %p844, %s48, 1
        %s846 = smul.addr %s845, 4
        %s847 = smul.addr %s846, 4
        %s848 = scalar_lea.vmem %s2, %s847
        %p849 = pneg %p128
        %p850 = pneg %p125
        %s851 = sand.u32 %s141, 1
        %s852 = scalar_lea.sflag [#allocation4], %s851
        %s853 = sand.u32 %s141, 1
        %s854 = smul.addr %s853, 16
        %s855 = scalar_lea.vmem [#allocation3], %s854
        %p856 = pneg %p154
        %p857 = pneg %p151
        %s858 = sand.u32 %s43, 1
        %s859 = scalar_lea.sflag [#allocation7], %s858
        %s860 = sand.u32 %s167, 1
        %s861 = smul.addr %s860, 16
        %s862 = scalar_lea.vmem [#allocation6], %s861
        %p863 = pneg %p180
        %p864 = pneg %p177
        %p865 = scmp.lt.s32.totalorder %s48, 1
        %s866 = scalar_select %p865, %s48, 1
        %s867 = scalar_lea.vmem %s5, %s866
        %p868 = pneg %p206
        %p869 = pneg %p203
        %p870 = scmp.lt.s32.totalorder %s48, 1
        %s871 = scalar_select %p870, %s48, 1
        %s872 = scalar_lea.vmem %s6, %s871
        %p873 = pneg %p232
        %p874 = pneg %p229
        %p875 = scmp.lt.s32.totalorder %s48, 1
        %s876 = scalar_select %p875, %s48, 1
        %s877 = scalar_lea.vmem %s7, %s876
        %p878 = pneg %p258
        %p879 = pneg %p255
        %s880 = sand.u32 %s43, 1
        %s881 = scalar_lea.sflag [#allocation7], %s880
        %s882 = sand.u32 %s271, 1
        %s883 = smul.addr %s882, 16
        %s884 = scalar_lea.vmem [#allocation8], %s883
        %p885 = pneg %p284
        %p886 = pneg %p281
        %p887 = scmp.lt.s32.totalorder %s48, 1
        %s888 = scalar_select %p887, %s48, 1
        %s889 = scalar_lea.vmem %s9, %s888
        %p890 = pneg %p310
        %p891 = pneg %p307
        %s892 = sand.u32 %s323, 1
        %s893 = scalar_lea.sflag [#allocation10], %s892
        %s894 = sand.u32 %s323, 1
        %s895 = smul.addr %s894, 16
        %s896 = scalar_lea.vmem [#allocation9], %s895
        %p897 = pneg %p336
        %p898 = pneg %p333
        %p899 = scmp.lt.s32.totalorder %s48, 1
        %s900 = scalar_select %p899, %s48, 1
        %s901 = scalar_lea.vmem %s11, %s900
        %p902 = pneg %p362
        %p903 = pneg %p359
        %p904 = scmp.lt.s32.totalorder %s48, 1
        %s905 = scalar_select %p904, %s48, 1
        %s906 = smul.addr %s905, 8
        %s907 = smul.addr %s906, 4
        %s908 = scalar_lea.vmem %s12, %s907
        %p909 = pneg %p388
        %p910 = pneg %p385
        %p911 = scmp.lt.s32.totalorder %s48, 1
        %s912 = scalar_select %p911, %s48, 1
        %s913 = scalar_lea.vmem %s13, %s912
        %p914 = pneg %p414
        %p915 = pneg %p411
        %p916 = scmp.lt.s32.totalorder %s48, 1
        %s917 = scalar_select %p916, %s48, 1
        %s918 = scalar_lea.vmem %s14, %s917
        %p919 = pneg %p440
        %p920 = pneg %p437
        %p921 = scmp.lt.s32.totalorder %s48, 1
        %s922 = scalar_select %p921, %s48, 1
        %s923 = scalar_lea.vmem %s15, %s922
        %p924 = pneg %p466
        %p925 = pneg %p463
        %p926 = scmp.lt.s32.totalorder %s48, 1
        %s927 = scalar_select %p926, %s48, 1
        %s928 = scalar_lea.vmem %s16, %s927
        %p929 = pneg %p492
        %p930 = pneg %p489
        %p931 = scmp.lt.s32.totalorder %s48, 1
        %s932 = scalar_select %p931, %s48, 1
        %s933 = scalar_lea.vmem %s17, %s932
        %p934 = pneg %p518
        %p935 = pneg %p515
        %p936 = pneg %p539
        %p937 = pneg %p536
        %p938 = pneg %p560
        %p939 = pneg %p557
        %p940 = pneg %p586
        %p941 = pneg %p583
        %s942 = sand.u32 %s573, 1
        %s943 = scalar_lea.sflag [#allocation5], %s942
        %s944 = sand.u32 %s573, 1
        %s945 = smul.addr %s944, 16
        %s946 = scalar_lea.vmem [#allocation11], %s945
        %p947 = scmp.lt.s32.totalorder %s47, 1
        %s948 = scalar_select %p947, %s47, 1
        %s949 = smul.addr %s948, 2
        %s950 = smul.addr %s949, 8
        %s951 = scalar_lea.vmem %s0, %s950
        %p952 = scmp.lt.s32.totalorder %s47, 1
        %s953 = scalar_select %p952, %s47, 1
        %s954 = smul.addr %s953, 2
        %s955 = smul.addr %s954, 8
        %s956 = scalar_lea.vmem %s1, %s955
        %p957 = scmp.lt.s32.totalorder %s48, 1
        %s958 = scalar_select %p957, %s48, 1
        %s959 = smul.addr %s958, 4
        %s960 = smul.addr %s959, 4
        %s961 = scalar_lea.vmem %s2, %s960
        %p962 = scmp.lt.s32.totalorder %s48, 1
        %s963 = scalar_select %p962, %s48, 1
        %s964 = scalar_lea.vmem %s5, %s963
        %p965 = scmp.lt.s32.totalorder %s48, 1
        %s966 = scalar_select %p965, %s48, 1
        %s967 = scalar_lea.vmem %s6, %s966
        %p968 = scmp.lt.s32.totalorder %s48, 1
        %s969 = scalar_select %p968, %s48, 1
        %s970 = scalar_lea.vmem %s7, %s969
        %p971 = scmp.lt.s32.totalorder %s48, 1
        %s972 = scalar_select %p971, %s48, 1
        %s973 = scalar_lea.vmem %s9, %s972
        %p974 = scmp.lt.s32.totalorder %s48, 1
        %s975 = scalar_select %p974, %s48, 1
        %s976 = scalar_lea.vmem %s11, %s975
        %p977 = scmp.lt.s32.totalorder %s48, 1
        %s978 = scalar_select %p977, %s48, 1
        %s979 = smul.addr %s978, 8
        %s980 = smul.addr %s979, 4
        %s981 = scalar_lea.vmem %s12, %s980
        %p982 = scmp.lt.s32.totalorder %s48, 1
        %s983 = scalar_select %p982, %s48, 1
        %s984 = scalar_lea.vmem %s13, %s983
        %p985 = scmp.lt.s32.totalorder %s48, 1
        %s986 = scalar_select %p985, %s48, 1
        %s987 = scalar_lea.vmem %s14, %s986
        %p988 = scmp.lt.s32.totalorder %s48, 1
        %s989 = scalar_select %p988, %s48, 1
        %s990 = scalar_lea.vmem %s15, %s989
        %p991 = scmp.lt.s32.totalorder %s48, 1
        %s992 = scalar_select %p991, %s48, 1
        %s993 = scalar_lea.vmem %s16, %s992
        %p994 = scmp.lt.s32.totalorder %s48, 1
        %s995 = scalar_select %p994, %s48, 1
        %s996 = scalar_lea.vmem %s17, %s995
        %p998 = scmp.eq.s32.totalorder %s48, 0
        // Predicated region
        $region117: #{tpu_custom_call.1} parent=99 // pred_check
          %p999 = pneg %p998
        $region118: #{tpu_custom_call.1} parent=99 // pred_check_branch
          %1001 = sbr.rel (%p999) target = $region120
        $region119: #{tpu_custom_call.1} parent=99 // pred_region
          %v1002 = vld [vmem:[%s951] sm:$0xff]
          %v1003 = vld [vmem:[%s951 + $0x8] sm:$0xff]
          %vm1004 = vcmask 261120
          %1005 = vst.msk [vmem:[%s946] sm:$0xff] %vm1004, %v1002
          %1006 = vst.msk [vmem:[%s946 + $0x8] sm:$0xff] %vm1004, %v1003
        $region120: #{tpu_custom_call.1} parent=99 // pred_fallthru
          _
        %v1007 = vld [vmem:[%s946] sm:$0xff]
        %v1008 = vld [vmem:[%s946 + $0x8] sm:$0xff]
        %v1009 = vld [vmem:[%s956] sm:$0xff]
        %v1010 = vld [vmem:[%s956 + $0x8] sm:$0xff]
        %v1011 = vadd.f32 %v1007, %v1009
        %v1012 = vadd.f32 %v1008, %v1010
        %v1013 = vpack.c.bf16 %v1012, %v1011
        %v1014 = vpack.c.bf16 %v1008, %v1007
        %v1015 = vld [vmem:[%s961] sm:$0xf]
        %v1016 = vld [vmem:[%s961 + $0x4] sm:$0xf]
        %v1017 = vld [vmem:[%s961 + $0x8] sm:$0xf]
        %v1018 = vld [vmem:[%s961 + $0xc] sm:$0xf]
        %v1019 = vld [vmem:[%s964] sm:$0x1]
        %v1021 = vlaneseq
        %v1022 = vshrl.u32 %v1021, 7
        %v1023 = vsub.s32 0, %v1022
        %v1024 = vrot.slane %v1019, %v1023
        %v1030 = vunpack.c.l.b16 %v1015
        %v1031 = vunpack.c.l.b16 %v1016
        %v1032 = vunpack.c.l.b16 %v1017
        %v1033 = vunpack.c.l.b16 %v1018
        %v1034 = vpack.c.b16 %v1031, %v1030
        %v1035 = vpack.c.b16 %v1033, %v1032
        %vm1038 = vcmask 261120
        %v1040 = vsel %vm1038, %v1013, 0
        %1042 = vmatprep.subr.bf16.mxu0 0
        %1043 = vmatpush1.bf16.msra.mxu0 %v1034
        %1044 = vmatprep.subr.bf16.mxu0 0
        %1045 = vmatpush1.bf16.msra.mxu0 %v1035
        %1046 = vmatprep.subr.bf16.mxu0 0
        %1047 = vmatpush1.bf16.msra.mxu0 0
        %1048 = vmatprep.subr.bf16.mxu0 0
        %1049 = vmatpush1.bf16.msra.mxu0 0
        %1050 = vmatprep.subr.bf16.mxu0 0
        %1051 = vmatpush1.bf16.msra.mxu0 0
        %1052 = vmatprep.subr.bf16.mxu0 0
        %1053 = vmatpush1.bf16.msra.mxu0 0
        %1054 = vmatprep.subr.bf16.mxu0 0
        %1055 = vmatpush1.bf16.msra.mxu0 0
        %1056 = vmatprep.subr.bf16.mxu0 0
        %1057 = vmatpush1.bf16.msra.mxu0 0
        %1058 = vmatprep.subr.bf16.mxu0 0
        %1059 = vmatpush1.bf16.msra.mxu0 0
        %1060 = vmatprep.subr.bf16.mxu0 0
        %1061 = vmatpush1.bf16.msra.mxu0 0
        %1062 = vmatprep.subr.bf16.mxu0 0
        %1063 = vmatpush1.bf16.msra.mxu0 0
        %1064 = vmatprep.subr.bf16.mxu0 0
        %1065 = vmatpush1.bf16.msra.mxu0 0
        %1066 = vmatprep.subr.bf16.mxu0 0
        %1067 = vmatpush1.bf16.msra.mxu0 0
        %1068 = vmatprep.subr.bf16.mxu0 0
        %1069 = vmatpush1.bf16.msra.mxu0 0
        %1070 = vmatprep.subr.bf16.mxu0 0
        %1071 = vmatpush1.bf16.msra.mxu0 0
        %1072 = vmatprep.subr.bf16.mxu0 0
        %1073 = vmatpush1.bf16.msra.mxu0 0
        %1074 = vmatprep.mubr.bf16.mxu0 0
        %1075 = vmatmul.mubr.bf16.gmra.mrb[0].mxu0 %v1040
        %v1076 = vpop.f32.mrb[0].mxu0
        %v1077 = vadd.f32 %v1024, %v1076
        %v1078 = vpop.f32.mrb[0].mxu0
        %v1079 = vpop.f32.mrb[0].mxu0
        %v1080 = vadd.f32 %v1024, %v1079
        %v1081 = vpop.f32.mrb[0].mxu0
        %1082 = vdwg.mxu0
        %v1083 = vld [vmem:[%s798] sm:$0xf]
        %v1084 = vld [vmem:[%s798 + $0x4] sm:$0xf]
        %v1085 = vld [vmem:[%s798 + $0x8] sm:$0xf]
        %v1086 = vld [vmem:[%s798 + $0xc] sm:$0xf]
        %v1087 = vld [vmem:[%s967] sm:$0x1]
        %v1089 = vlaneseq
        %v1090 = vshrl.u32 %v1089, 7
        %v1091 = vsub.s32 0, %v1090
        %v1092 = vrot.slane %v1087, %v1091
        %v1098 = vunpack.c.l.b16 %v1083
        %v1099 = vunpack.c.l.b16 %v1084
        %v1100 = vunpack.c.l.b16 %v1085
        %v1101 = vunpack.c.l.b16 %v1086
        %v1102 = vpack.c.b16 %v1099, %v1098
        %v1103 = vpack.c.b16 %v1101, %v1100
        %1106 = vmatprep.subr.bf16.mxu0 0
        %1107 = vmatpush1.bf16.msra.mxu0 %v1102
        %1108 = vmatprep.subr.bf16.mxu0 0
        %1109 = vmatpush1.bf16.msra.mxu0 %v1103
        %1110 = vmatprep.subr.bf16.mxu0 0
        %1111 = vmatpush1.bf16.msra.mxu0 0
        %1112 = vmatprep.subr.bf16.mxu0 0
        %1113 = vmatpush1.bf16.msra.mxu0 0
        %1114 = vmatprep.subr.bf16.mxu0 0
        %1115 = vmatpush1.bf16.msra.mxu0 0
        %1116 = vmatprep.subr.bf16.mxu0 0
        %1117 = vmatpush1.bf16.msra.mxu0 0
        %1118 = vmatprep.subr.bf16.mxu0 0
        %1119 = vmatpush1.bf16.msra.mxu0 0
        %1120 = vmatprep.subr.bf16.mxu0 0
        %1121 = vmatpush1.bf16.msra.mxu0 0
        %1122 = vmatprep.subr.bf16.mxu0 0
        %1123 = vmatpush1.bf16.msra.mxu0 0
        %1124 = vmatprep.subr.bf16.mxu0 0
        %1125 = vmatpush1.bf16.msra.mxu0 0
        %1126 = vmatprep.subr.bf16.mxu0 0
        %1127 = vmatpush1.bf16.msra.mxu0 0
        %1128 = vmatprep.subr.bf16.mxu0 0
        %1129 = vmatpush1.bf16.msra.mxu0 0
        %1130 = vmatprep.subr.bf16.mxu0 0
        %1131 = vmatpush1.bf16.msra.mxu0 0
        %1132 = vmatprep.subr.bf16.mxu0 0
        %1133 = vmatpush1.bf16.msra.mxu0 0
        %1134 = vmatprep.subr.bf16.mxu0 0
        %1135 = vmatpush1.bf16.msra.mxu0 0
        %1136 = vmatprep.subr.bf16.mxu0 0
        %1137 = vmatpush1.bf16.msra.mxu0 0
        %1138 = vmatprep.mubr.bf16.mxu0 0
        %1139 = vmatmul.mubr.bf16.gmra.mrb[0].mxu0 %v1040
        %v1140 = vpop.f32.mrb[0].mxu0
        %v1141 = vadd.f32 %v1092, %v1140
        %v1142 = vpop.f32.mrb[0].mxu0
        %v1143 = vpop.f32.mrb[0].mxu0
        %v1144 = vadd.f32 %v1092, %v1143
        %v1145 = vpop.f32.mrb[0].mxu0
        %1146 = vdwg.mxu0
        %v1147 = vld [vmem:[%s807] sm:$0xf]
        %v1148 = vld [vmem:[%s807 + $0x4] sm:$0xf]
        %v1149 = vld [vmem:[%s807 + $0x8] sm:$0xf]
        %v1150 = vld [vmem:[%s807 + $0xc] sm:$0xf]
        %v1151 = vld [vmem:[%s970] sm:$0x1]
        %v1153 = vlaneseq
        %v1154 = vshrl.u32 %v1153, 7
        %v1155 = vsub.s32 0, %v1154
        %v1156 = vrot.slane %v1151, %v1155
        %v1162 = vunpack.c.l.b16 %v1147
        %v1163 = vunpack.c.l.b16 %v1148
        %v1164 = vunpack.c.l.b16 %v1149
        %v1165 = vunpack.c.l.b16 %v1150
        %v1166 = vpack.c.b16 %v1163, %v1162
        %v1167 = vpack.c.b16 %v1165, %v1164
        %v1171 = vsel %vm1038, %v1014, 0
        %1173 = vmatprep.subr.bf16.mxu0 0
        %1174 = vmatpush1.bf16.msra.mxu0 %v1166
        %1175 = vmatprep.subr.bf16.mxu0 0
        %1176 = vmatpush1.bf16.msra.mxu0 %v1167
        %1177 = vmatprep.subr.bf16.mxu0 0
        %1178 = vmatpush1.bf16.msra.mxu0 0
        %1179 = vmatprep.subr.bf16.mxu0 0
        %1180 = vmatpush1.bf16.msra.mxu0 0
        %1181 = vmatprep.subr.bf16.mxu0 0
        %1182 = vmatpush1.bf16.msra.mxu0 0
        %1183 = vmatprep.subr.bf16.mxu0 0
        %1184 = vmatpush1.bf16.msra.mxu0 0
        %1185 = vmatprep.subr.bf16.mxu0 0
        %1186 = vmatpush1.bf16.msra.mxu0 0
        %1187 = vmatprep.subr.bf16.mxu0 0
        %1188 = vmatpush1.bf16.msra.mxu0 0
        %1189 = vmatprep.subr.bf16.mxu0 0
        %1190 = vmatpush1.bf16.msra.mxu0 0
        %1191 = vmatprep.subr.bf16.mxu0 0
        %1192 = vmatpush1.bf16.msra.mxu0 0
        %1193 = vmatprep.subr.bf16.mxu0 0
        %1194 = vmatpush1.bf16.msra.mxu0 0
        %1195 = vmatprep.subr.bf16.mxu0 0
        %1196 = vmatpush1.bf16.msra.mxu0 0
        %1197 = vmatprep.subr.bf16.mxu0 0
        %1198 = vmatpush1.bf16.msra.mxu0 0
        %1199 = vmatprep.subr.bf16.mxu0 0
        %1200 = vmatpush1.bf16.msra.mxu0 0
        %1201 = vmatprep.subr.bf16.mxu0 0
        %1202 = vmatpush1.bf16.msra.mxu0 0
        %1203 = vmatprep.subr.bf16.mxu0 0
        %1204 = vmatpush1.bf16.msra.mxu0 0
        %1205 = vmatprep.mubr.bf16.mxu0 0
        %1206 = vmatmul.mubr.bf16.gmra.mrb[0].mxu0 %v1171
        %v1207 = vpop.f32.mrb[0].mxu0
        %v1208 = vadd.f32 %v1156, %v1207
        %v1209 = vpop.f32.mrb[0].mxu0
        %v1210 = vpop.f32.mrb[0].mxu0
        %v1211 = vadd.f32 %v1156, %v1210
        %v1212 = vpop.f32.mrb[0].mxu0
        %1213 = vdwg.mxu0
        %v1214 = vpack.c.bf16 %v1080, %v1077
        %v1215 = vpack.c.bf16 %v1144, %v1141
        %v1216 = vpack.c.bf16 %v1211, %v1208
        %vm1217 = vcmask 64512
        %v1219 = vsel %vm1217, %v1214, 0
        %v1222 = vsel %vm1217, %v1215, 0
        %1224 = vmatprep.subr.bf16.mxu0 0
        %1225 = vmatpush1.bf16.xpose.msra.mxu0 %v1222
        %1226 = vmatprep.subr.bf16.mxu0 0
        %1227 = vmatpush1.bf16.xpose.msra.mxu0 0
        %1228 = vmatprep.subr.bf16.mxu0 0
        %1229 = vmatpush1.bf16.xpose.msra.mxu0 0
        %1230 = vmatprep.subr.bf16.mxu0 0
        %1231 = vmatpush1.bf16.xpose.msra.mxu0 0
        %1232 = vmatprep.subr.bf16.mxu0 0
        %1233 = vmatpush1.bf16.xpose.msra.mxu0 0
        %1234 = vmatprep.subr.bf16.mxu0 0
        %1235 = vmatpush1.bf16.xpose.msra.mxu0 0
        %1236 = vmatprep.subr.bf16.mxu0 0
        %1237 = vmatpush1.bf16.xpose.msra.mxu0 0
        %1238 = vmatprep.subr.bf16.mxu0 0
        %1239 = vmatpush1.bf16.xpose.msra.mxu0 0
        %1240 = vmatprep.subr.bf16.mxu0 0
        %1241 = vmatpush1.bf16.xpose.msra.mxu0 0
        %1242 = vmatprep.subr.bf16.mxu0 0
        %1243 = vmatpush1.bf16.xpose.msra.mxu0 0
        %1244 = vmatprep.subr.bf16.mxu0 0
        %1245 = vmatpush1.bf16.xpose.msra.mxu0 0
        %1246 = vmatprep.subr.bf16.mxu0 0
        %1247 = vmatpush1.bf16.xpose.msra.mxu0 0
        %1248 = vmatprep.subr.bf16.mxu0 0
        %1249 = vmatpush1.bf16.xpose.msra.mxu0 0
        %1250 = vmatprep.subr.bf16.mxu0 0
        %1251 = vmatpush1.bf16.xpose.msra.mxu0 0
        %1252 = vmatprep.subr.bf16.mxu0 0
        %1253 = vmatpush1.bf16.xpose.msra.mxu0 0
        %1254 = vmatprep.subr.bf16.mxu0 0
        %1255 = vmatpush1.bf16.xpose.msra.mxu0 0
        %1256 = vmatprep.mubr.bf16.mxu0 0
        %1257 = vmatmul.mubr.bf16.gmra.mrb[0].mxu0 %v1219
        %v1258 = vpop.f32.mrb[0].mxu0
        %v1259 = vadd.f32 0.0, %v1258
        %v1260 = vpop.f32.mrb[0].mxu0
        %v1261 = vpop.f32.mrb[0].mxu0
        %v1262 = vadd.f32 0.0, %v1261
        %v1263 = vpop.f32.mrb[0].mxu0
        %1264 = vdwg.mxu0
        %v1265 = vmul.f32 %v1259, 0.35355338
        %v1266 = vmul.f32 %v1262, 0.35355338
        %vm1267 = vcmask 130048
        %v1268 = vsel %vm1267, %v1265, -inf
        %1269 = vmax.xlane.f32.xlu0 %v1268
        %v1270 = vpop.xlane.xlu0 %1269
        %v1271 = vsel %vm1267, %v1266, -inf
        %1272 = vmax.xlane.f32.xlu0 %v1271
        %v1273 = vpop.xlane.xlu0 %1272
        %v1274 = vsub.f32 %v1265, %v1270
        %v1275 = vsub.f32 %v1266, %v1273
        %v1276 = vmul.f32 %v1274, 1.442695
        %v1277 = vpow.pop %v1276
        %v1278 = vmul.f32 %v1275, 1.442695
        %v1279 = vpow.pop %v1278
        %v1280 = vsel %vm1267, %v1277, 0.0
        %1281 = vadd.xlane.f32.xlu0 %v1280
        %v1282 = vpop.xlane.xlu0 %1281
        %v1283 = vsel %vm1267, %v1279, 0.0
        %1284 = vadd.xlane.f32.xlu0 %v1283
        %v1285 = vpop.xlane.xlu0 %1284
        %v1286 = vrcp.pop %v1282
        %v1287 = vrcp.pop %v1285
        %v1288 = vmul.f32 %v1277, %v1286
        %v1289 = vmul.f32 %v1279, %v1287
        %v1290 = vpack.c.bf16 %v1289, %v1288
        %v1292 = vsel %vm1267, %v1290, 0
        %1294 = vmatprep.subr.bf16.mxu0 0
        %1295 = vmatpush1.bf16.msra.mxu0 %v1216
        %1296 = vmatprep.subr.bf16.mxu0 0
        %1297 = vmatpush1.bf16.msra.mxu0 0
        %1298 = vmatprep.subr.bf16.mxu0 0
        %1299 = vmatpush1.bf16.msra.mxu0 0
        %1300 = vmatprep.subr.bf16.mxu0 0
        %1301 = vmatpush1.bf16.msra.mxu0 0
        %1302 = vmatprep.subr.bf16.mxu0 0
        %1303 = vmatpush1.bf16.msra.mxu0 0
        %1304 = vmatprep.subr.bf16.mxu0 0
        %1305 = vmatpush1.bf16.msra.mxu0 0
        %1306 = vmatprep.subr.bf16.mxu0 0
        %1307 = vmatpush1.bf16.msra.mxu0 0
        %1308 = vmatprep.subr.bf16.mxu0 0
        %1309 = vmatpush1.bf16.msra.mxu0 0
        %1310 = vmatprep.subr.bf16.mxu0 0
        %1311 = vmatpush1.bf16.msra.mxu0 0
        %1312 = vmatprep.subr.bf16.mxu0 0
        %1313 = vmatpush1.bf16.msra.mxu0 0
        %1314 = vmatprep.subr.bf16.mxu0 0
        %1315 = vmatpush1.bf16.msra.mxu0 0
        %1316 = vmatprep.subr.bf16.mxu0 0
        %1317 = vmatpush1.bf16.msra.mxu0 0
        %1318 = vmatprep.subr.bf16.mxu0 0
        %1319 = vmatpush1.bf16.msra.mxu0 0
        %1320 = vmatprep.subr.bf16.mxu0 0
        %1321 = vmatpush1.bf16.msra.mxu0 0
        %1322 = vmatprep.subr.bf16.mxu0 0
        %1323 = vmatpush1.bf16.msra.mxu0 0
        %1324 = vmatprep.subr.bf16.mxu0 0
        %1325 = vmatpush1.bf16.msra.mxu0 0
        %1326 = vmatprep.mubr.bf16.mxu0 0
        %1327 = vmatmul.mubr.bf16.gmra.mrb[0].mxu0 %v1292
        %v1328 = vpop.f32.mrb[0].mxu0
        %v1329 = vadd.f32 0.0, %v1328
        %v1330 = vpop.f32.mrb[0].mxu0
        %v1331 = vpop.f32.mrb[0].mxu0
        %v1332 = vadd.f32 0.0, %v1331
        %v1333 = vpop.f32.mrb[0].mxu0
        %1334 = vdwg.mxu0
        %1335 = vst.msk [vmem:[#allocation2] sm:$0xff] %vm1217, %v1329
        %1336 = vst.msk [vmem:[#allocation2 + $0x8] sm:$0xff] %vm1217, %v1332
        %1338 = vrot.lane.b32.xlu0 %v1214, 120
        %v1339 = vpop.permute.xlu0 %1338
        %1341 = vrot.lane.b32.xlu0 %v1215, 120
        %v1342 = vpop.permute.xlu0 %1341
        %v1344 = vsel %vm1217, %v1339, 0
        %v1347 = vsel %vm1217, %v1342, 0
        %1349 = vmatprep.subr.bf16.mxu0 0
        %1350 = vmatpush1.bf16.xpose.msra.mxu0 %v1347
        %1351 = vmatprep.subr.bf16.mxu0 0
        %1352 = vmatpush1.bf16.xpose.msra.mxu0 0
        %1353 = vmatprep.subr.bf16.mxu0 0
        %1354 = vmatpush1.bf16.xpose.msra.mxu0 0
        %1355 = vmatprep.subr.bf16.mxu0 0
        %1356 = vmatpush1.bf16.xpose.msra.mxu0 0
        %1357 = vmatprep.subr.bf16.mxu0 0
        %1358 = vmatpush1.bf16.xpose.msra.mxu0 0
        %1359 = vmatprep.subr.bf16.mxu0 0
        %1360 = vmatpush1.bf16.xpose.msra.mxu0 0
        %1361 = vmatprep.subr.bf16.mxu0 0
        %1362 = vmatpush1.bf16.xpose.msra.mxu0 0
        %1363 = vmatprep.subr.bf16.mxu0 0
        %1364 = vmatpush1.bf16.xpose.msra.mxu0 0
        %1365 = vmatprep.subr.bf16.mxu0 0
        %1366 = vmatpush1.bf16.xpose.msra.mxu0 0
        %1367 = vmatprep.subr.bf16.mxu0 0
        %1368 = vmatpush1.bf16.xpose.msra.mxu0 0
        %1369 = vmatprep.subr.bf16.mxu0 0
        %1370 = vmatpush1.bf16.xpose.msra.mxu0 0
        %1371 = vmatprep.subr.bf16.mxu0 0
        %1372 = vmatpush1.bf16.xpose.msra.mxu0 0
        %1373 = vmatprep.subr.bf16.mxu0 0
        %1374 = vmatpush1.bf16.xpose.msra.mxu0 0
        %1375 = vmatprep.subr.bf16.mxu0 0
        %1376 = vmatpush1.bf16.xpose.msra.mxu0 0
        %1377 = vmatprep.subr.bf16.mxu0 0
        %1378 = vmatpush1.bf16.xpose.msra.mxu0 0
        %1379 = vmatprep.subr.bf16.mxu0 0
        %1380 = vmatpush1.bf16.xpose.msra.mxu0 0
        %1381 = vmatprep.mubr.bf16.mxu0 0
        %1382 = vmatmul.mubr.bf16.gmra.mrb[0].mxu0 %v1344
        %v1383 = vpop.f32.mrb[0].mxu0
        %v1384 = vadd.f32 0.0, %v1383
        %v1385 = vpop.f32.mrb[0].mxu0
        %v1386 = vpop.f32.mrb[0].mxu0
        %v1387 = vadd.f32 0.0, %v1386
        %v1388 = vpop.f32.mrb[0].mxu0
        %1389 = vdwg.mxu0
        %v1390 = vmul.f32 %v1384, 0.35355338
        %v1391 = vmul.f32 %v1387, 0.35355338
        %v1392 = vsel %vm1267, %v1390, -inf
        %1393 = vmax.xlane.f32.xlu0 %v1392
        %v1394 = vpop.xlane.xlu0 %1393
        %v1395 = vsel %vm1267, %v1391, -inf
        %1396 = vmax.xlane.f32.xlu0 %v1395
        %v1397 = vpop.xlane.xlu0 %1396
        %v1398 = vsub.f32 %v1390, %v1394
        %v1399 = vsub.f32 %v1391, %v1397
        %v1400 = vmul.f32 %v1398, 1.442695
        %v1401 = vpow.pop %v1400
        %v1402 = vmul.f32 %v1399, 1.442695
        %v1403 = vpow.pop %v1402
        %v1404 = vsel %vm1267, %v1401, 0.0
        %1405 = vadd.xlane.f32.xlu0 %v1404
        %v1406 = vpop.xlane.xlu0 %1405
        %v1407 = vsel %vm1267, %v1403, 0.0
        %1408 = vadd.xlane.f32.xlu0 %v1407
        %v1409 = vpop.xlane.xlu0 %1408
        %v1410 = vrcp.pop %v1406
        %v1411 = vrcp.pop %v1409
        %v1412 = vmul.f32 %v1401, %v1410
        %v1413 = vmul.f32 %v1403, %v1411
        %v1414 = vpack.c.bf16 %v1413, %v1412
        %1416 = vrot.lane.b32.xlu0 %v1216, 120
        %v1417 = vpop.permute.xlu0 %1416
        %v1420 = vsel %vm1267, %v1414, 0
        %1422 = vmatprep.subr.bf16.mxu0 0
        %1423 = vmatpush1.bf16.msra.mxu0 %v1417
        %1424 = vmatprep.subr.bf16.mxu0 0
        %1425 = vmatpush1.bf16.msra.mxu0 0
        %1426 = vmatprep.subr.bf16.mxu0 0
        %1427 = vmatpush1.bf16.msra.mxu0 0
        %1428 = vmatprep.subr.bf16.mxu0 0
        %1429 = vmatpush1.bf16.msra.mxu0 0
        %1430 = vmatprep.subr.bf16.mxu0 0
        %1431 = vmatpush1.bf16.msra.mxu0 0
        %1432 = vmatprep.subr.bf16.mxu0 0
        %1433 = vmatpush1.bf16.msra.mxu0 0
        %1434 = vmatprep.subr.bf16.mxu0 0
        %1435 = vmatpush1.bf16.msra.mxu0 0
        %1436 = vmatprep.subr.bf16.mxu0 0
        %1437 = vmatpush1.bf16.msra.mxu0 0
        %1438 = vmatprep.subr.bf16.mxu0 0
        %1439 = vmatpush1.bf16.msra.mxu0 0
        %1440 = vmatprep.subr.bf16.mxu0 0
        %1441 = vmatpush1.bf16.msra.mxu0 0
        %1442 = vmatprep.subr.bf16.mxu0 0
        %1443 = vmatpush1.bf16.msra.mxu0 0
        %1444 = vmatprep.subr.bf16.mxu0 0
        %1445 = vmatpush1.bf16.msra.mxu0 0
        %1446 = vmatprep.subr.bf16.mxu0 0
        %1447 = vmatpush1.bf16.msra.mxu0 0
        %1448 = vmatprep.subr.bf16.mxu0 0
        %1449 = vmatpush1.bf16.msra.mxu0 0
        %1450 = vmatprep.subr.bf16.mxu0 0
        %1451 = vmatpush1.bf16.msra.mxu0 0
        %1452 = vmatprep.subr.bf16.mxu0 0
        %1453 = vmatpush1.bf16.msra.mxu0 0
        %1454 = vmatprep.mubr.bf16.mxu0 0
        %1455 = vmatmul.mubr.bf16.gmra.mrb[0].mxu0 %v1420
        %v1456 = vpop.f32.mrb[0].mxu0
        %v1457 = vadd.f32 0.0, %v1456
        %v1458 = vpop.f32.mrb[0].mxu0
        %v1459 = vpop.f32.mrb[0].mxu0
        %v1460 = vadd.f32 0.0, %v1459
        %v1461 = vpop.f32.mrb[0].mxu0
        %1462 = vdwg.mxu0
        %1465 = vrot.lane.b32.xlu0 %v1457, 8
        %v1466 = vpop.permute.xlu0 %1465
        %1467 = vrot.lane.b32.xlu0 %v1460, 8
        %v1468 = vpop.permute.xlu0 %1467
        %vm1471 = vcmask 130112
        %1472 = vst.msk [vmem:[#allocation2] sm:$0xff] %vm1471, %v1466
        %1473 = vst.msk [vmem:[#allocation2 + $0x8] sm:$0xff] %vm1471, %v1468
        %1474 = vrot.lane.b32.xlu0 %v1214, 112
        %v1475 = vpop.permute.xlu0 %1474
        %1476 = vrot.lane.b32.xlu0 %v1215, 112
        %v1477 = vpop.permute.xlu0 %1476
        %v1479 = vsel %vm1217, %v1475, 0
        %v1482 = vsel %vm1217, %v1477, 0
        %1484 = vmatprep.subr.bf16.mxu0 0
        %1485 = vmatpush1.bf16.xpose.msra.mxu0 %v1482
        %1486 = vmatprep.subr.bf16.mxu0 0
        %1487 = vmatpush1.bf16.xpose.msra.mxu0 0
        %1488 = vmatprep.subr.bf16.mxu0 0
        %1489 = vmatpush1.bf16.xpose.msra.mxu0 0
        %1490 = vmatprep.subr.bf16.mxu0 0
        %1491 = vmatpush1.bf16.xpose.msra.mxu0 0
        %1492 = vmatprep.subr.bf16.mxu0 0
        %1493 = vmatpush1.bf16.xpose.msra.mxu0 0
        %1494 = vmatprep.subr.bf16.mxu0 0
        %1495 = vmatpush1.bf16.xpose.msra.mxu0 0
        %1496 = vmatprep.subr.bf16.mxu0 0
        %1497 = vmatpush1.bf16.xpose.msra.mxu0 0
        %1498 = vmatprep.subr.bf16.mxu0 0
        %1499 = vmatpush1.bf16.xpose.msra.mxu0 0
        %1500 = vmatprep.subr.bf16.mxu0 0
        %1501 = vmatpush1.bf16.xpose.msra.mxu0 0
        %1502 = vmatprep.subr.bf16.mxu0 0
        %1503 = vmatpush1.bf16.xpose.msra.mxu0 0
        %1504 = vmatprep.subr.bf16.mxu0 0
        %1505 = vmatpush1.bf16.xpose.msra.mxu0 0
        %1506 = vmatprep.subr.bf16.mxu0 0
        %1507 = vmatpush1.bf16.xpose.msra.mxu0 0
        %1508 = vmatprep.subr.bf16.mxu0 0
        %1509 = vmatpush1.bf16.xpose.msra.mxu0 0
        %1510 = vmatprep.subr.bf16.mxu0 0
        %1511 = vmatpush1.bf16.xpose.msra.mxu0 0
        %1512 = vmatprep.subr.bf16.mxu0 0
        %1513 = vmatpush1.bf16.xpose.msra.mxu0 0
        %1514 = vmatprep.subr.bf16.mxu0 0
        %1515 = vmatpush1.bf16.xpose.msra.mxu0 0
        %1516 = vmatprep.mubr.bf16.mxu0 0
        %1517 = vmatmul.mubr.bf16.gmra.mrb[0].mxu0 %v1479
        %v1518 = vpop.f32.mrb[0].mxu0
        %v1519 = vadd.f32 0.0, %v1518
        %v1520 = vpop.f32.mrb[0].mxu0
        %v1521 = vpop.f32.mrb[0].mxu0
        %v1522 = vadd.f32 0.0, %v1521
        %v1523 = vpop.f32.mrb[0].mxu0
        %1524 = vdwg.mxu0
        %v1525 = vmul.f32 %v1519, 0.35355338
        %v1526 = vmul.f32 %v1522, 0.35355338
        %v1527 = vsel %vm1267, %v1525, -inf
        %1528 = vmax.xlane.f32.xlu0 %v1527
        %v1529 = vpop.xlane.xlu0 %1528
        %v1530 = vsel %vm1267, %v1526, -inf
        %1531 = vmax.xlane.f32.xlu0 %v1530
        %v1532 = vpop.xlane.xlu0 %1531
        %v1533 = vsub.f32 %v1525, %v1529
        %v1534 = vsub.f32 %v1526, %v1532
        %v1535 = vmul.f32 %v1533, 1.442695
        %v1536 = vpow.pop %v1535
        %v1537 = vmul.f32 %v1534, 1.442695
        %v1538 = vpow.pop %v1537
        %v1539 = vsel %vm1267, %v1536, 0.0
        %1540 = vadd.xlane.f32.xlu0 %v1539
        %v1541 = vpop.xlane.xlu0 %1540
        %v1542 = vsel %vm1267, %v1538, 0.0
        %1543 = vadd.xlane.f32.xlu0 %v1542
        %v1544 = vpop.xlane.xlu0 %1543
        %v1545 = vrcp.pop %v1541
        %v1546 = vrcp.pop %v1544
        %v1547 = vmul.f32 %v1536, %v1545
        %v1548 = vmul.f32 %v1538, %v1546
        %v1549 = vpack.c.bf16 %v1548, %v1547
        %1550 = vrot.lane.b32.xlu0 %v1216, 112
        %v1551 = vpop.permute.xlu0 %1550
        %v1554 = vsel %vm1267, %v1549, 0
        %1556 = vmatprep.subr.bf16.mxu0 0
        %1557 = vmatpush1.bf16.msra.mxu0 %v1551
        %1558 = vmatprep.subr.bf16.mxu0 0
        %1559 = vmatpush1.bf16.msra.mxu0 0
        %1560 = vmatprep.subr.bf16.mxu0 0
        %1561 = vmatpush1.bf16.msra.mxu0 0
        %1562 = vmatprep.subr.bf16.mxu0 0
        %1563 = vmatpush1.bf16.msra.mxu0 0
        %1564 = vmatprep.subr.bf16.mxu0 0
        %1565 = vmatpush1.bf16.msra.mxu0 0
        %1566 = vmatprep.subr.bf16.mxu0 0
        %1567 = vmatpush1.bf16.msra.mxu0 0
        %1568 = vmatprep.subr.bf16.mxu0 0
        %1569 = vmatpush1.bf16.msra.mxu0 0
        %1570 = vmatprep.subr.bf16.mxu0 0
        %1571 = vmatpush1.bf16.msra.mxu0 0
        %1572 = vmatprep.subr.bf16.mxu0 0
        %1573 = vmatpush1.bf16.msra.mxu0 0
        %1574 = vmatprep.subr.bf16.mxu0 0
        %1575 = vmatpush1.bf16.msra.mxu0 0
        %1576 = vmatprep.subr.bf16.mxu0 0
        %1577 = vmatpush1.bf16.msra.mxu0 0
        %1578 = vmatprep.subr.bf16.mxu0 0
        %1579 = vmatpush1.bf16.msra.mxu0 0
        %1580 = vmatprep.subr.bf16.mxu0 0
        %1581 = vmatpush1.bf16.msra.mxu0 0
        %1582 = vmatprep.subr.bf16.mxu0 0
        %1583 = vmatpush1.bf16.msra.mxu0 0
        %1584 = vmatprep.subr.bf16.mxu0 0
        %1585 = vmatpush1.bf16.msra.mxu0 0
        %1586 = vmatprep.subr.bf16.mxu0 0
        %1587 = vmatpush1.bf16.msra.mxu0 0
        %1588 = vmatprep.mubr.bf16.mxu0 0
        %1589 = vmatmul.mubr.bf16.gmra.mrb[0].mxu0 %v1554
        %v1590 = vpop.f32.mrb[0].mxu0
        %v1591 = vadd.f32 0.0, %v1590
        %v1592 = vpop.f32.mrb[0].mxu0
        %v1593 = vpop.f32.mrb[0].mxu0
        %v1594 = vadd.f32 0.0, %v1593
        %v1595 = vpop.f32.mrb[0].mxu0
        %1596 = vdwg.mxu0
        %1599 = vrot.lane.b32.xlu0 %v1591, 16
        %v1600 = vpop.permute.xlu0 %1599
        %1601 = vrot.lane.b32.xlu0 %v1594, 16
        %v1602 = vpop.permute.xlu0 %1601
        %vm1605 = vcmask 195712
        %1606 = vst.msk [vmem:[#allocation2] sm:$0xff] %vm1605, %v1600
        %1607 = vst.msk [vmem:[#allocation2 + $0x8] sm:$0xff] %vm1605, %v1602
        %1608 = vrot.lane.b32.xlu0 %v1214, 104
        %v1609 = vpop.permute.xlu0 %1608
        %1610 = vrot.lane.b32.xlu0 %v1215, 104
        %v1611 = vpop.permute.xlu0 %1610
        %v1613 = vsel %vm1217, %v1609, 0
        %v1616 = vsel %vm1217, %v1611, 0
        %1618 = vmatprep.subr.bf16.mxu0 0
        %1619 = vmatpush1.bf16.xpose.msra.mxu0 %v1616
        %1620 = vmatprep.subr.bf16.mxu0 0
        %1621 = vmatpush1.bf16.xpose.msra.mxu0 0
        %1622 = vmatprep.subr.bf16.mxu0 0
        %1623 = vmatpush1.bf16.xpose.msra.mxu0 0
        %1624 = vmatprep.subr.bf16.mxu0 0
        %1625 = vmatpush1.bf16.xpose.msra.mxu0 0
        %1626 = vmatprep.subr.bf16.mxu0 0
        %1627 = vmatpush1.bf16.xpose.msra.mxu0 0
        %1628 = vmatprep.subr.bf16.mxu0 0
        %1629 = vmatpush1.bf16.xpose.msra.mxu0 0
        %1630 = vmatprep.subr.bf16.mxu0 0
        %1631 = vmatpush1.bf16.xpose.msra.mxu0 0
        %1632 = vmatprep.subr.bf16.mxu0 0
        %1633 = vmatpush1.bf16.xpose.msra.mxu0 0
        %1634 = vmatprep.subr.bf16.mxu0 0
        %1635 = vmatpush1.bf16.xpose.msra.mxu0 0
        %1636 = vmatprep.subr.bf16.mxu0 0
        %1637 = vmatpush1.bf16.xpose.msra.mxu0 0
        %1638 = vmatprep.subr.bf16.mxu0 0
        %1639 = vmatpush1.bf16.xpose.msra.mxu0 0
        %1640 = vmatprep.subr.bf16.mxu0 0
        %1641 = vmatpush1.bf16.xpose.msra.mxu0 0
        %1642 = vmatprep.subr.bf16.mxu0 0
        %1643 = vmatpush1.bf16.xpose.msra.mxu0 0
        %1644 = vmatprep.subr.bf16.mxu0 0
        %1645 = vmatpush1.bf16.xpose.msra.mxu0 0
        %1646 = vmatprep.subr.bf16.mxu0 0
        %1647 = vmatpush1.bf16.xpose.msra.mxu0 0
        %1648 = vmatprep.subr.bf16.mxu0 0
        %1649 = vmatpush1.bf16.xpose.msra.mxu0 0
        %1650 = vmatprep.mubr.bf16.mxu0 0
        %1651 = vmatmul.mubr.bf16.gmra.mrb[0].mxu0 %v1613
        %v1652 = vpop.f32.mrb[0].mxu0
        %v1653 = vadd.f32 0.0, %v1652
        %v1654 = vpop.f32.mrb[0].mxu0
        %v1655 = vpop.f32.mrb[0].mxu0
        %v1656 = vadd.f32 0.0, %v1655
        %v1657 = vpop.f32.mrb[0].mxu0
        %1658 = vdwg.mxu0
        %v1659 = vmul.f32 %v1653, 0.35355338
        %v1660 = vmul.f32 %v1656, 0.35355338
        %v1661 = vsel %vm1267, %v1659, -inf
        %1662 = vmax.xlane.f32.xlu0 %v1661
        %v1663 = vpop.xlane.xlu0 %1662
        %v1664 = vsel %vm1267, %v1660, -inf
        %1665 = vmax.xlane.f32.xlu0 %v1664
        %v1666 = vpop.xlane.xlu0 %1665
        %v1667 = vsub.f32 %v1659, %v1663
        %v1668 = vsub.f32 %v1660, %v1666
        %v1669 = vmul.f32 %v1667, 1.442695
        %v1670 = vpow.pop %v1669
        %v1671 = vmul.f32 %v1668, 1.442695
        %v1672 = vpow.pop %v1671
        %v1673 = vsel %vm1267, %v1670, 0.0
        %1674 = vadd.xlane.f32.xlu0 %v1673
        %v1675 = vpop.xlane.xlu0 %1674
        %v1676 = vsel %vm1267, %v1672, 0.0
        %1677 = vadd.xlane.f32.xlu0 %v1676
        %v1678 = vpop.xlane.xlu0 %1677
        %v1679 = vrcp.pop %v1675
        %v1680 = vrcp.pop %v1678
        %v1681 = vmul.f32 %v1670, %v1679
        %v1682 = vmul.f32 %v1672, %v1680
        %v1683 = vpack.c.bf16 %v1682, %v1681
        %1684 = vrot.lane.b32.xlu0 %v1216, 104
        %v1685 = vpop.permute.xlu0 %1684
        %v1688 = vsel %vm1267, %v1683, 0
        %1690 = vmatprep.subr.bf16.mxu0 0
        %1691 = vmatpush1.bf16.msra.mxu0 %v1685
        %1692 = vmatprep.subr.bf16.mxu0 0
        %1693 = vmatpush1.bf16.msra.mxu0 0
        %1694 = vmatprep.subr.bf16.mxu0 0
        %1695 = vmatpush1.bf16.msra.mxu0 0
        %1696 = vmatprep.subr.bf16.mxu0 0
        %1697 = vmatpush1.bf16.msra.mxu0 0
        %1698 = vmatprep.subr.bf16.mxu0 0
        %1699 = vmatpush1.bf16.msra.mxu0 0
        %1700 = vmatprep.subr.bf16.mxu0 0
        %1701 = vmatpush1.bf16.msra.mxu0 0
        %1702 = vmatprep.subr.bf16.mxu0 0
        %1703 = vmatpush1.bf16.msra.mxu0 0
        %1704 = vmatprep.subr.bf16.mxu0 0
        %1705 = vmatpush1.bf16.msra.mxu0 0
        %1706 = vmatprep.subr.bf16.mxu0 0
        %1707 = vmatpush1.bf16.msra.mxu0 0
        %1708 = vmatprep.subr.bf16.mxu0 0
        %1709 = vmatpush1.bf16.msra.mxu0 0
        %1710 = vmatprep.subr.bf16.mxu0 0
        %1711 = vmatpush1.bf16.msra.mxu0 0
        %1712 = vmatprep.subr.bf16.mxu0 0
        %1713 = vmatpush1.bf16.msra.mxu0 0
        %1714 = vmatprep.subr.bf16.mxu0 0
        %1715 = vmatpush1.bf16.msra.mxu0 0
        %1716 = vmatprep.subr.bf16.mxu0 0
        %1717 = vmatpush1.bf16.msra.mxu0 0
        %1718 = vmatprep.subr.bf16.mxu0 0
        %1719 = vmatpush1.bf16.msra.mxu0 0
        %1720 = vmatprep.subr.bf16.mxu0 0
        %1721 = vmatpush1.bf16.msra.mxu0 0
        %1722 = vmatprep.mubr.bf16.mxu0 0
        %1723 = vmatmul.mubr.bf16.gmra.mrb[0].mxu0 %v1688
        %v1724 = vpop.f32.mrb[0].mxu0
        %v1725 = vadd.f32 0.0, %v1724
        %v1726 = vpop.f32.mrb[0].mxu0
        %v1727 = vpop.f32.mrb[0].mxu0
        %v1728 = vadd.f32 0.0, %v1727
        %v1729 = vpop.f32.mrb[0].mxu0
        %1730 = vdwg.mxu0
        %1733 = vrot.lane.b32.xlu0 %v1725, 24
        %v1734 = vpop.permute.xlu0 %1733
        %1735 = vrot.lane.b32.xlu0 %v1728, 24
        %v1736 = vpop.permute.xlu0 %1735
        %vm1739 = vcmask 261312
        %1740 = vst.msk [vmem:[#allocation2] sm:$0xff] %vm1739, %v1734
        %1741 = vst.msk [vmem:[#allocation2 + $0x8] sm:$0xff] %vm1739, %v1736
        %v1742 = vld [vmem:[#allocation2] sm:$0xff]
        %v1743 = vld [vmem:[#allocation2 + $0x8] sm:$0xff]
        %v1744 = vpack.c.bf16 %v1743, %v1742
        %v1745 = vld [vmem:[%s816] sm:$0xf]
        %v1746 = vld [vmem:[%s816 + $0x4] sm:$0xf]
        %v1747 = vld [vmem:[%s816 + $0x8] sm:$0xf]
        %v1748 = vld [vmem:[%s816 + $0xc] sm:$0xf]
        %v1749 = vld [vmem:[%s973] sm:$0x1]
        %v1751 = vlaneseq
        %v1752 = vshrl.u32 %v1751, 7
        %v1753 = vsub.s32 0, %v1752
        %v1754 = vrot.slane %v1749, %v1753
        %v1760 = vunpack.c.l.b16 %v1745
        %v1761 = vunpack.c.l.b16 %v1746
        %v1762 = vunpack.c.l.b16 %v1747
        %v1763 = vunpack.c.l.b16 %v1748
        %v1764 = vpack.c.b16 %v1761, %v1760
        %v1765 = vpack.c.b16 %v1763, %v1762
        %v1769 = vsel %vm1038, %v1744, 0
        %1771 = vmatprep.subr.bf16.mxu0 0
        %1772 = vmatpush1.bf16.msra.mxu0 %v1764
        %1773 = vmatprep.subr.bf16.mxu0 0
        %1774 = vmatpush1.bf16.msra.mxu0 %v1765
        %1775 = vmatprep.subr.bf16.mxu0 0
        %1776 = vmatpush1.bf16.msra.mxu0 0
        %1777 = vmatprep.subr.bf16.mxu0 0
        %1778 = vmatpush1.bf16.msra.mxu0 0
        %1779 = vmatprep.subr.bf16.mxu0 0
        %1780 = vmatpush1.bf16.msra.mxu0 0
        %1781 = vmatprep.subr.bf16.mxu0 0
        %1782 = vmatpush1.bf16.msra.mxu0 0
        %1783 = vmatprep.subr.bf16.mxu0 0
        %1784 = vmatpush1.bf16.msra.mxu0 0
        %1785 = vmatprep.subr.bf16.mxu0 0
        %1786 = vmatpush1.bf16.msra.mxu0 0
        %1787 = vmatprep.subr.bf16.mxu0 0
        %1788 = vmatpush1.bf16.msra.mxu0 0
        %1789 = vmatprep.subr.bf16.mxu0 0
        %1790 = vmatpush1.bf16.msra.mxu0 0
        %1791 = vmatprep.subr.bf16.mxu0 0
        %1792 = vmatpush1.bf16.msra.mxu0 0
        %1793 = vmatprep.subr.bf16.mxu0 0
        %1794 = vmatpush1.bf16.msra.mxu0 0
        %1795 = vmatprep.subr.bf16.mxu0 0
        %1796 = vmatpush1.bf16.msra.mxu0 0
        %1797 = vmatprep.subr.bf16.mxu0 0
        %1798 = vmatpush1.bf16.msra.mxu0 0
        %1799 = vmatprep.subr.bf16.mxu0 0
        %1800 = vmatpush1.bf16.msra.mxu0 0
        %1801 = vmatprep.subr.bf16.mxu0 0
        %1802 = vmatpush1.bf16.msra.mxu0 0
        %1803 = vmatprep.mubr.bf16.mxu0 0
        %1804 = vmatmul.mubr.bf16.gmra.mrb[0].mxu0 %v1769
        %v1805 = vpop.f32.mrb[0].mxu0
        %v1806 = vadd.f32 %v1754, %v1805
        %v1807 = vpop.f32.mrb[0].mxu0
        %v1808 = vpop.f32.mrb[0].mxu0
        %v1809 = vadd.f32 %v1754, %v1808
        %v1810 = vpop.f32.mrb[0].mxu0
        %1811 = vdwg.mxu0
        %v1812 = vadd.f32 %v1007, %v1806
        %v1813 = vadd.f32 %v1008, %v1809
        %v1814 = vld [vmem:[%s987] sm:$0x1]
        %v1815 = vld [vmem:[%s990] sm:$0x1]
        %v1816 = vsel %vm1038, %v1812, 0.0
        %1817 = vadd.xlane.f32.xlu0 %v1816
        %v1818 = vpop.xlane.xlu0 %1817
        %v1819 = vsel %vm1038, %v1813, 0.0
        %1820 = vadd.xlane.f32.xlu0 %v1819
        %v1821 = vpop.xlane.xlu0 %1820
        %v1822 = vrcp.pop 32.0
        %v1823 = vmul.f32 %v1818, %v1822
        %v1824 = vmul.f32 %v1821, %v1822
        %v1825 = vsub.f32 %v1812, %v1823
        %v1826 = vsub.f32 %v1813, %v1824
        %v1827 = vmul.f32 %v1825, %v1825
        %v1828 = vmul.f32 %v1826, %v1826
        %v1829 = vsel %vm1038, %v1827, 0.0
        %1830 = vadd.xlane.f32.xlu0 %v1829
        %v1831 = vpop.xlane.xlu0 %1830
        %v1832 = vsel %vm1038, %v1828, 0.0
        %1833 = vadd.xlane.f32.xlu0 %v1832
        %v1834 = vpop.xlane.xlu0 %1833
        %v1835 = vmul.f32 %v1831, %v1822
        %v1836 = vmul.f32 %v1834, %v1822
        %v1837 = vadd.f32 %v1835, 1e-05
        %v1838 = vadd.f32 %v1836, 1e-05
        %v1839 = vrsqrt.pop %v1837
        %v1840 = vrsqrt.pop %v1838
        %v1841 = vmul.f32 %v1825, %v1839
        %v1842 = vmul.f32 %v1826, %v1840
        %v1844 = vlaneseq
        %v1845 = vshrl.u32 %v1844, 7
        %v1846 = vsub.s32 0, %v1845
        %v1847 = vrot.slane %v1814, %v1846
        %v1849 = vmul.f32 %v1841, %v1847
        %v1850 = vmul.f32 %v1842, %v1847
        %v1852 = vlaneseq
        %v1853 = vshrl.u32 %v1852, 7
        %v1854 = vsub.s32 0, %v1853
        %v1855 = vrot.slane %v1815, %v1854
        %v1857 = vadd.f32 %v1849, %v1855
        %v1858 = vadd.f32 %v1850, %v1855
        %v1859 = vpack.c.bf16 %v1858, %v1857
        %v1860 = vld [vmem:[%s825] sm:$0xf]
        %v1861 = vld [vmem:[%s825 + $0x4] sm:$0xf]
        %v1862 = vld [vmem:[%s825 + $0x8] sm:$0xf]
        %v1863 = vld [vmem:[%s825 + $0xc] sm:$0xf]
        %v1864 = vld [vmem:[%s976] sm:$0x1]
        %v1866 = vlaneseq
        %v1867 = vshrl.u32 %v1866, 7
        %v1868 = vsub.s32 0, %v1867
        %v1869 = vrot.slane %v1864, %v1868
        %v1875 = vunpack.c.l.b16 %v1860
        %v1876 = vunpack.c.l.b16 %v1861
        %v1877 = vunpack.c.l.b16 %v1862
        %v1878 = vunpack.c.l.b16 %v1863
        %v1879 = vpack.c.b16 %v1876, %v1875
        %v1880 = vpack.c.b16 %v1878, %v1877
        %v1884 = vsel %vm1038, %v1859, 0
        %1886 = vmatprep.subr.bf16.mxu0 0
        %1887 = vmatpush1.bf16.msra.mxu0 %v1879
        %1888 = vmatprep.subr.bf16.mxu0 0
        %1889 = vmatpush1.bf16.msra.mxu0 %v1880
        %1890 = vmatprep.subr.bf16.mxu0 0
        %1891 = vmatpush1.bf16.msra.mxu0 0
        %1892 = vmatprep.subr.bf16.mxu0 0
        %1893 = vmatpush1.bf16.msra.mxu0 0
        %1894 = vmatprep.subr.bf16.mxu0 0
        %1895 = vmatpush1.bf16.msra.mxu0 0
        %1896 = vmatprep.subr.bf16.mxu0 0
        %1897 = vmatpush1.bf16.msra.mxu0 0
        %1898 = vmatprep.subr.bf16.mxu0 0
        %1899 = vmatpush1.bf16.msra.mxu0 0
        %1900 = vmatprep.subr.bf16.mxu0 0
        %1901 = vmatpush1.bf16.msra.mxu0 0
        %1902 = vmatprep.subr.bf16.mxu0 0
        %1903 = vmatpush1.bf16.msra.mxu0 0
        %1904 = vmatprep.subr.bf16.mxu0 0
        %1905 = vmatpush1.bf16.msra.mxu0 0
        %1906 = vmatprep.subr.bf16.mxu0 0
        %1907 = vmatpush1.bf16.msra.mxu0 0
        %1908 = vmatprep.subr.bf16.mxu0 0
        %1909 = vmatpush1.bf16.msra.mxu0 0
        %1910 = vmatprep.subr.bf16.mxu0 0
        %1911 = vmatpush1.bf16.msra.mxu0 0
        %1912 = vmatprep.subr.bf16.mxu0 0
        %1913 = vmatpush1.bf16.msra.mxu0 0
        %1914 = vmatprep.subr.bf16.mxu0 0
        %1915 = vmatpush1.bf16.msra.mxu0 0
        %1916 = vmatprep.subr.bf16.mxu0 0
        %1917 = vmatpush1.bf16.msra.mxu0 0
        %1918 = vmatprep.mubr.bf16.mxu0 0
        %1919 = vmatmul.mubr.bf16.gmra.mrb[0].mxu0 %v1884
        %v1920 = vpop.f32.mrb[0].mxu0
        %v1921 = vadd.f32 %v1869, %v1920
        %v1922 = vpop.f32.mrb[0].mxu0
        %v1923 = vpop.f32.mrb[0].mxu0
        %v1924 = vadd.f32 %v1869, %v1923
        %v1925 = vpop.f32.mrb[0].mxu0
        %1926 = vdwg.mxu0
        %v1927 = vmax.f32 %v1921, 0.0
        %v1928 = vmax.f32 %v1924, 0.0
        %v1929 = vpack.c.bf16 %v1928, %v1927
        %v1930 = vld [vmem:[%s981] sm:$0xf]
        %v1931 = vld [vmem:[%s981 + $0x4] sm:$0xf]
        %v1932 = vld [vmem:[%s981 + $0x8] sm:$0xf]
        %v1933 = vld [vmem:[%s981 + $0xc] sm:$0xf]
        %v1934 = vld [vmem:[%s981 + $0x10] sm:$0xf]
        %v1935 = vld [vmem:[%s981 + $0x14] sm:$0xf]
        %v1936 = vld [vmem:[%s981 + $0x18] sm:$0xf]
        %v1937 = vld [vmem:[%s981 + $0x1c] sm:$0xf]
        %v1938 = vld [vmem:[%s984] sm:$0x1]
        %v1940 = vlaneseq
        %v1941 = vshrl.u32 %v1940, 7
        %v1942 = vsub.s32 0, %v1941
        %v1943 = vrot.slane %v1938, %v1942
        %v1953 = vunpack.c.l.b16 %v1930
        %v1954 = vunpack.c.l.b16 %v1931
        %v1955 = vunpack.c.l.b16 %v1932
        %v1956 = vunpack.c.l.b16 %v1933
        %v1957 = vunpack.c.l.b16 %v1934
        %v1958 = vunpack.c.l.b16 %v1935
        %v1959 = vunpack.c.l.b16 %v1936
        %v1960 = vunpack.c.l.b16 %v1937
        %v1961 = vpack.c.b16 %v1954, %v1953
        %v1962 = vpack.c.b16 %v1956, %v1955
        %v1963 = vpack.c.b16 %v1958, %v1957
        %v1964 = vpack.c.b16 %v1960, %v1959
        %vm1969 = vcmask 523264
        %v1971 = vsel %vm1969, %v1929, 0
        %1973 = vmatprep.subr.bf16.mxu0 0
        %1974 = vmatpush1.bf16.msra.mxu0 %v1961
        %1975 = vmatprep.subr.bf16.mxu0 0
        %1976 = vmatpush1.bf16.msra.mxu0 %v1962
        %1977 = vmatprep.subr.bf16.mxu0 0
        %1978 = vmatpush1.bf16.msra.mxu0 %v1963
        %1979 = vmatprep.subr.bf16.mxu0 0
        %1980 = vmatpush1.bf16.msra.mxu0 %v1964
        %1981 = vmatprep.subr.bf16.mxu0 0
        %1982 = vmatpush1.bf16.msra.mxu0 0
        %1983 = vmatprep.subr.bf16.mxu0 0
        %1984 = vmatpush1.bf16.msra.mxu0 0
        %1985 = vmatprep.subr.bf16.mxu0 0
        %1986 = vmatpush1.bf16.msra.mxu0 0
        %1987 = vmatprep.subr.bf16.mxu0 0
        %1988 = vmatpush1.bf16.msra.mxu0 0
        %1989 = vmatprep.subr.bf16.mxu0 0
        %1990 = vmatpush1.bf16.msra.mxu0 0
        %1991 = vmatprep.subr.bf16.mxu0 0
        %1992 = vmatpush1.bf16.msra.mxu0 0
        %1993 = vmatprep.subr.bf16.mxu0 0
        %1994 = vmatpush1.bf16.msra.mxu0 0
        %1995 = vmatprep.subr.bf16.mxu0 0
        %1996 = vmatpush1.bf16.msra.mxu0 0
        %1997 = vmatprep.subr.bf16.mxu0 0
        %1998 = vmatpush1.bf16.msra.mxu0 0
        %1999 = vmatprep.subr.bf16.mxu0 0
        %2000 = vmatpush1.bf16.msra.mxu0 0
        %2001 = vmatprep.subr.bf16.mxu0 0
        %2002 = vmatpush1.bf16.msra.mxu0 0
        %2003 = vmatprep.subr.bf16.mxu0 0
        %2004 = vmatpush1.bf16.msra.mxu0 0
        %2005 = vmatprep.mubr.bf16.mxu0 0
        %2006 = vmatmul.mubr.bf16.gmra.mrb[0].mxu0 %v1971
        %v2007 = vpop.f32.mrb[0].mxu0
        %v2008 = vadd.f32 %v1943, %v2007
        %v2009 = vpop.f32.mrb[0].mxu0
        %v2010 = vpop.f32.mrb[0].mxu0
        %v2011 = vadd.f32 %v1943, %v2010
        %v2012 = vpop.f32.mrb[0].mxu0
        %2013 = vdwg.mxu0
        %v2014 = vadd.f32 %v1857, %v2008
        %v2015 = vadd.f32 %v1858, %v2011
        %v2016 = vld [vmem:[%s993] sm:$0x1]
        %v2017 = vld [vmem:[%s996] sm:$0x1]
        %v2018 = vsel %vm1038, %v2014, 0.0
        %2019 = vadd.xlane.f32.xlu0 %v2018
        %v2020 = vpop.xlane.xlu0 %2019
        %v2021 = vsel %vm1038, %v2015, 0.0
        %2022 = vadd.xlane.f32.xlu0 %v2021
        %v2023 = vpop.xlane.xlu0 %2022
        %v2024 = vmul.f32 %v2020, %v1822
        %v2025 = vmul.f32 %v2023, %v1822
        %v2026 = vsub.f32 %v2014, %v2024
        %v2027 = vsub.f32 %v2015, %v2025
        %v2028 = vmul.f32 %v2026, %v2026
        %v2029 = vmul.f32 %v2027, %v2027
        %v2030 = vsel %vm1038, %v2028, 0.0
        %2031 = vadd.xlane.f32.xlu0 %v2030
        %v2032 = vpop.xlane.xlu0 %2031
        %v2033 = vsel %vm1038, %v2029, 0.0
        %2034 = vadd.xlane.f32.xlu0 %v2033
        %v2035 = vpop.xlane.xlu0 %2034
        %v2036 = vmul.f32 %v2032, %v1822
        %v2037 = vmul.f32 %v2035, %v1822
        %v2038 = vadd.f32 %v2036, 1e-05
        %v2039 = vadd.f32 %v2037, 1e-05
        %v2040 = vrsqrt.pop %v2038
        %v2041 = vrsqrt.pop %v2039
        %v2042 = vmul.f32 %v2026, %v2040
        %v2043 = vmul.f32 %v2027, %v2041
        %v2045 = vlaneseq
        %v2046 = vshrl.u32 %v2045, 7
        %v2047 = vsub.s32 0, %v2046
        %v2048 = vrot.slane %v2016, %v2047
        %v2050 = vmul.f32 %v2042, %v2048
        %v2051 = vmul.f32 %v2043, %v2048
        %v2053 = vlaneseq
        %v2054 = vshrl.u32 %v2053, 7
        %v2055 = vsub.s32 0, %v2054
        %v2056 = vrot.slane %v2017, %v2055
        %v2058 = vadd.f32 %v2050, %v2056
        %v2059 = vadd.f32 %v2051, %v2056
        %2060 = vst.msk [vmem:[%s946] sm:$0xff] %vm1038, %v2058
        %2061 = vst.msk [vmem:[%s946 + $0x8] sm:$0xff] %vm1038, %v2059
        %p2062 = scmp.eq.s32.totalorder %s48, 1
        // Predicated region
        $region121: #{tpu_custom_call.1} parent=99 // pred_check
          %p2063 = pneg %p2062
        $region122: #{tpu_custom_call.1} parent=99 // pred_check_branch
          %2065 = sbr.rel (%p2063) target = $region124
        $region123: #{tpu_custom_call.1} parent=99 // pred_region
          %v2066 = vld [vmem:[%s18] sm:$0x1]
          %v2067 = vld [vmem:[%s19] sm:$0x1]
          %v2068 = vsel %vm1038, %v2058, 0.0
          %2069 = vadd.xlane.f32.xlu0 %v2068
          %v2070 = vpop.xlane.xlu0 %2069
          %v2071 = vsel %vm1038, %v2059, 0.0
          %2072 = vadd.xlane.f32.xlu0 %v2071
          %v2073 = vpop.xlane.xlu0 %2072
          %v2074 = vmul.f32 %v2070, %v1822
          %v2075 = vmul.f32 %v2073, %v1822
          %v2076 = vsub.f32 %v2058, %v2074
          %v2077 = vsub.f32 %v2059, %v2075
          %v2078 = vmul.f32 %v2076, %v2076
          %v2079 = vmul.f32 %v2077, %v2077
          %v2080 = vsel %vm1038, %v2078, 0.0
          %2081 = vadd.xlane.f32.xlu0 %v2080
          %v2082 = vpop.xlane.xlu0 %2081
          %v2083 = vsel %vm1038, %v2079, 0.0
          %2084 = vadd.xlane.f32.xlu0 %v2083
          %v2085 = vpop.xlane.xlu0 %2084
          %v2086 = vmul.f32 %v2082, %v1822
          %v2087 = vmul.f32 %v2085, %v1822
          %v2088 = vadd.f32 %v2086, 1e-05
          %v2089 = vadd.f32 %v2087, 1e-05
          %v2090 = vrsqrt.pop %v2088
          %v2091 = vrsqrt.pop %v2089
          %v2092 = vmul.f32 %v2076, %v2090
          %v2093 = vmul.f32 %v2077, %v2091
          %v2095 = vlaneseq
          %v2096 = vshrl.u32 %v2095, 7
          %v2097 = vsub.s32 0, %v2096
          %v2098 = vrot.slane %v2066, %v2097
          %v2100 = vmul.f32 %v2092, %v2098
          %v2101 = vmul.f32 %v2093, %v2098
          %v2103 = vlaneseq
          %v2104 = vshrl.u32 %v2103, 7
          %v2105 = vsub.s32 0, %v2104
          %v2106 = vrot.slane %v2067, %v2105
          %v2108 = vadd.f32 %v2100, %v2106
          %v2109 = vadd.f32 %v2101, %v2106
          %2110 = vst.msk [vmem:[%s946] sm:$0xff] %vm1038, %v2108
          %2111 = vst.msk [vmem:[%s946 + $0x8] sm:$0xff] %vm1038, %v2109
        $region124: #{tpu_custom_call.1} parent=99 // pred_fallthru
          _
        %s2112 = sand.u32 %s573, 1
        %s2113 = scalar_lea.sflag [#allocation5], %s2112
        %s2114 = sand.u32 %s573, 1
        %s2115 = smul.addr %s2114, 16
        %s2116 = scalar_lea.vmem [#allocation11], %s2115
        // Predicated region
        $region125: #{tpu_custom_call.1} parent=99 // pred_check
          %p2117 = pneg %p583
        $region126: #{tpu_custom_call.1} parent=99 // pred_check_branch
          %2119 = sbr.rel (%p2117) target = $region128
        $region127: #{tpu_custom_call.1} parent=99 // pred_region
          %s2121 = ssub.s32 256, 256
          %2122 = vsyncadd %s2113, %s2121
          %s2123 = smul.addr %s47, 2
          %s2124 = smul.addr %s2123, 128
          %s2125 = scalar_lea.hbm %s20, %s2124
          %s2126 = sshll.u32 %s2116, 4
          %s2127 = int_to_ptr.vmem [resolvable:$true] %s2126
          %2132 = dma.vmem_to_hbm [thread:$0]  %s2127, 256, %s2125, %s2113, 128, 128, 8
        $region128: #{tpu_custom_call.1} parent=99 // pred_fallthru
          _
      $region100: #{tpu_custom_call.1} parent=5 // pred_fallthru
        _
      %p2133 = scmp.le.s32.totalorder 2, %s38
      // Predicated region
      $region129: #{tpu_custom_call.1} parent=5 // pred_check
        %p2134 = pneg %p2133
      $region130: #{tpu_custom_call.1} parent=5 // pred_check_branch
        %2136 = sbr.rel (%p2134) target = $region132
      $region131: #{tpu_custom_call.1} parent=5 // pred_region
        %s2137 = ssub.s32 %s38, 2
        // Predicated region
        $region133: #{tpu_custom_call.1} parent=131 // pred_check
          %p2138 = pneg %p589
        $region134: #{tpu_custom_call.1} parent=131 // pred_check_branch
          %2140 = sbr.rel (%p2138) target = $region136
        $region135: #{tpu_custom_call.1} parent=131 // pred_region
          %s2141 = sand.u32 %s574, 1
          %s2142 = scalar_lea.sflag [#allocation5], %s2141
          %s2143 = sand.u32 %s574, 1
          %s2144 = smul.addr %s2143, 16
          %s2145 = scalar_lea.vmem [#allocation11], %s2144
          %2146 = dma.done %s2142, 256
        $region136: #{tpu_custom_call.1} parent=131 // pred_fallthru
          _
      $region132: #{tpu_custom_call.1} parent=5 // pred_fallthru
        _
    $region6: #{tpu_custom_call.1} parent=1 // loop_footer
      %s42 = sadd.s32 1, %s38
    $region7: #{tpu_custom_call.1} parent=1 // loop_footer_branch
      %37 = sbr.rel target = $region3
    $region8: #{tpu_custom_call.1} parent=1 // loop_exit
      _
    %2147 = vsyncpa [#allocation4], 1
    %s2148 = scalar_lea.sflag [#allocation4], 1
    %2149 = vsyncpa %s2148, 1
    %2150 = vsyncpa [#allocation7], 1
    %s2151 = scalar_lea.sflag [#allocation7], 1
    %2152 = vsyncpa %s2151, 1
    %2153 = vsyncpa [#allocation10], 1
    %s2154 = scalar_lea.sflag [#allocation10], 1
    %2155 = vsyncpa %s2154, 1
    %2156 = vsyncpa [#allocation5], 1
    %s2157 = scalar_lea.sflag [#allocation5], 1
    %2158 = vsyncpa %s2157, 1

</llo_original>
